<compile_context>
chip_gen: v7x
topology: tpu7x:2x2x1
jax: 0.10.0
libtpu: 0.0.40
codegen_flags: <defaults>
</compile_context>

<pallas_src>
from collections.abc import Iterable

import jax
import jax.numpy as jnp
from jax.experimental import pallas as pl
from jax.experimental.pallas import tpu as pltpu


LANE = 128      # feature-dim padding multiple (lane-dense, unmasked vld/vst + full MXU tiles)
SUBLANE = 16    # bf16 sublane packing -> batch tiles in multiples of 16


def _round_up(x, m):
    return ((x + m - 1) // m) * m


def _vmem_capacity_bytes():
    """Per-TensorCore VMEM capacity; conservative fallback if the query is unavailable."""
    try:
        cap = int(pltpu.get_tpu_info().vmem_capacity_bytes)
        if cap > 0:
            return cap
    except Exception:
        pass
    return 64 << 20   # v7x per-TC VMEM (smallest current generation)


def _vmem_limit_bytes(resident_param_bytes, param_buffers, tile_bytes):
    cap = _vmem_capacity_bytes()
    need = param_buffers * resident_param_bytes + tile_bytes + (2 << 20)
    hi = max(cap - (16 << 20), 16 << 20)      # leave headroom for compiler-internal scratch
    return int(min(max(need, 16 << 20), hi))


_ACT = {
    "relu": lambda v: jnp.maximum(v, 0.0),
    "sigmoid": jax.nn.sigmoid,
}


def _param_specs(param_arrays, single_buffer):
    """Constant-index (VMEM-resident) specs for the weight/bias stack."""
    specs = []
    for arr in param_arrays:
        if single_buffer:
            # Buffered(1): constant block -> fetched once, 1x VMEM residency (not 2x).
            specs.append(pl.BlockSpec(arr.shape, lambda i: (0, 0),
                                      pipeline_mode=pl.Buffered(1)))
        else:
            specs.append(pl.BlockSpec(arr.shape, lambda i: (0, 0)))
    return specs


# ----------------------------------------------------------------------------- kernels


def _make_fused_kernel(n_cat, has_num, n_layers, activation, compute_dtype):
    """Fused: embedding lookup (as one-hot matmul vs fused tables) + full MLP, per batch tile."""
    act = _ACT[activation]

    def kernel(*refs):
        o_ref = refs[-1]
        cat_ref = refs[0]
        off = 1
        num_ref = None
        if has_num:
            num_ref = refs[off]
            off += 1
        params = refs[off:-1]
        # params layout: [T_0 .. T_{n_cat-1}, (W1_num if has_num), b1, W2, b2, ..., WL, bL]

        idx = cat_ref[...]                       # (tile_b, n_cat) int32
        tile_b = idx.shape[0]

        acc = None
        if has_num:
            w_num = params[n_cat][...]           # (num_pad, out1_pad) bf16
            acc = jnp.dot(num_ref[...].astype(compute_dtype), w_num,
                          preferred_element_type=jnp.float32)
        for c in range(n_cat):
            tbl = params[c][...]                 # (vocab_pad_c, out1_pad) bf16, = emb_c @ W1_seg_c
            iota = jax.lax.broadcasted_iota(jnp.int32, (tile_b, tbl.shape[0]), 1)
            onehot = (idx[:, c:c + 1] == iota).astype(compute_dtype)
            contrib = jnp.dot(onehot, tbl, preferred_element_type=jnp.float32)
            acc = contrib if acc is None else acc + contrib

        p = n_cat + (1 if has_num else 0)
        b1 = params[p][...]                      # (1, out1_pad) f32
        p += 1
        h = act(acc + b1)                        # bias-add + activation in f32 (VPU/EUP)

        for _ in range(1, n_layers):
            w = params[p][...]
            b = params[p + 1][...]
            p += 2
            h = act(jnp.dot(h.astype(compute_dtype), w,
                            preferred_element_type=jnp.float32) + b)

        o_ref[...] = h.astype(o_ref.dtype)       # bf16 writeback (halved HBM output bytes)

    return kernel


def _make_dense_kernel(n_layers, activation, compute_dtype):
    """Fallback: already-concatenated padded input tile -> stacked Linear+activation."""
    act = _ACT[activation]

    def kernel(x_ref, *refs):
        o_ref = refs[-1]
        params = refs[:-1]
        h = x_ref[...]
        for l in range(n_layers):
            w = params[2 * l][...]
            b = params[2 * l + 1][...]
            h = act(jnp.dot(h.astype(compute_dtype), w,
                            preferred_element_type=jnp.float32) + b)
        o_ref[...] = h.astype(o_ref.dtype)

    return kernel


# ----------------------------------------------------------------------------- wrappers


def _fused_forward(cat_idx, num, param_arrays, *, n_cat, has_num, n_layers,
                   activation, out_pad, tile_b, compute_dtype, single_buffer=True):
    B_pad = cat_idx.shape[0]
    assert B_pad % tile_b == 0
    grid = (B_pad // tile_b,)
    kernel = _make_fused_kernel(n_cat, has_num, n_layers, activation, compute_dtype)
    inputs = [cat_idx] + ([num] if has_num else []) + list(param_arrays)

    def build(sb):
        in_specs = [pl.BlockSpec((tile_b, cat_idx.shape[1]), lambda i: (i, 0))]
        if has_num:
            in_specs.append(pl.BlockSpec((tile_b, num.shape[1]), lambda i: (i, 0)))
        in_specs += _param_specs(param_arrays, sb)
        out_spec = pl.BlockSpec((tile_b, out_pad), lambda i: (i, 0))

        param_bytes = sum(a.size * a.dtype.itemsize for a in param_arrays)
        max_pad = max(a.shape[-1] for a in param_arrays)
        tile_bytes = (
            2 * tile_b * cat_idx.shape[1] * 4                        # int32 index tile, dbl-buf
            + (2 * tile_b * num.shape[1] * 2 if has_num else 0)      # bf16 numerical tile
            + 2 * tile_b * out_pad * 2                               # bf16 output tile
            + 2 * tile_b * max_pad * 4                               # f32 acc + h (widest layer)
            + tile_b * sum(p.shape[0] for p in param_arrays[:n_cat]) * 2  # one-hot temporaries
        )
        vmem_limit = _vmem_limit_bytes(param_bytes, 1 if sb else 2, tile_bytes)

        return pl.pallas_call(
            kernel,
            out_shape=jax.ShapeDtypeStruct((B_pad, out_pad), compute_dtype),
            grid=grid,
            in_specs=in_specs,
            out_specs=out_spec,
            compiler_params=pltpu.CompilerParams(
                dimension_semantics=("parallel",),      # shard batch tiles across TCs
                vmem_limit_bytes=vmem_limit,
            ),
        )

    try:
        return build(single_buffer)(*inputs)
    except Exception:
        if not single_buffer:
            raise
        # TODO(synk): Buffered(1) single-buffering rejected on this build; use default buffering.
        return build(False)(*inputs)


def _dense_forward(x_padded, param_arrays, *, n_layers, activation, out_pad,
                   tile_b, compute_dtype, single_buffer=True):
    B_pad, in_pad = x_padded.shape
    assert B_pad % tile_b == 0
    grid = (B_pad // tile_b,)
    kernel = _make_dense_kernel(n_layers, activation, compute_dtype)
    inputs = [x_padded] + list(param_arrays)

    def build(sb):
        in_specs = [pl.BlockSpec((tile_b, in_pad), lambda i: (i, 0))]
        in_specs += _param_specs(param_arrays, sb)
        param_bytes = sum(a.size * a.dtype.itemsize for a in param_arrays)
        max_pad = max([in_pad] + [a.shape[-1] for a in param_arrays])
        tile_bytes = (2 * tile_b * in_pad * 2 + 2 * tile_b * out_pad * 2
                      + 2 * tile_b * max_pad * 4)
        vmem_limit = _vmem_limit_bytes(param_bytes, 1 if sb else 2, tile_bytes)
        return pl.pallas_call(
            kernel,
            out_shape=jax.ShapeDtypeStruct((B_pad, out_pad), compute_dtype),
            grid=grid,
            in_specs=in_specs,
            out_specs=pl.BlockSpec((tile_b, out_pad), lambda i: (i, 0)),
            compiler_params=pltpu.CompilerParams(
                dimension_semantics=("parallel",),
                vmem_limit_bytes=vmem_limit,
            ),
        )

    try:
        return build(single_buffer)(*inputs)
    except Exception:
        if not single_buffer:
            raise
        return build(False)(*inputs)


# ----------------------------------------------------------------------------- module


class BaseMLPPallas:
    """Deterministic re-implementation of the PyTorch BaseMLP forward pass."""

    MAX_TILE_B = 512          # upper bound on batch tile rows
    FUSE_VOCAB_LIMIT = 2048   # fused (one-hot) path only for small VMEM-resident vocabularies

    def __init__(self, n_categorical, n_numerical, vocab_sizes, emb_dims,
                 layer_dims, output_dim, activation="relu", seed=0,
                 compute_dtype=jnp.bfloat16):
        self.n_categorical = n_categorical
        self.n_numerical = n_numerical
        # NOTE: the reference PyTorch BaseMLP never forwards `activation` to DenseLayer,
        # so its layers always use ReLU; keep "relu" default to match.
        self.activation = activation
        self.compute_dtype = compute_dtype

        if not isinstance(vocab_sizes, Iterable):
            vocab_sizes = [vocab_sizes for _ in range(n_categorical)]
        elif len(vocab_sizes) != n_categorical:
            raise ValueError("vocab_sizes length mismatch")
        if not isinstance(emb_dims, Iterable):
            emb_dims = [emb_dims for _ in range(n_categorical)]
        elif len(emb_dims) != n_categorical:
            raise ValueError("emb_dims length mismatch")
        vocab_sizes = list(vocab_sizes)
        emb_dims = list(emb_dims)

        key = jax.random.PRNGKey(seed)

        # nn.Embedding default init: N(0, 1)
        self.embedding_tables = []
        for i in range(n_categorical):
            key, sub = jax.random.split(key)
            self.embedding_tables.append(
                jax.random.normal(sub, (vocab_sizes[i], emb_dims[i]), jnp.float32))

        input_dim = sum(emb_dims) + n_numerical
        self.input_dim = input_dim
        self.output_dim = output_dim

        # Faithfully replicate the (quirky) layer-dimension construction of BaseMLP.
        dims = [(input_dim, layer_dims[0])]
        for i in range(len(layer_dims[1:-1])):
            dims.append((layer_dims[i - 1], layer_dims[i]))
        dims.append((layer_dims[-1], output_dim))
        for (_, d_out_prev), (d_in, _) in zip(dims[:-1], dims[1:]):
            if d_out_prev != d_in:
                raise ValueError(
                    f"layer_dims produce a non-composing Linear chain ({d_out_prev}->{d_in}); "
                    "the original PyTorch BaseMLP would also fail on this configuration.")
        self.n_layers = len(dims)

        # nn.Linear default init: U(-1/sqrt(in), 1/sqrt(in)) for weight and bias.
        self.layer_params = []        # f32 master copies (reference path)
        for (d_in, d_out) in dims:
            key, kw, kb = jax.random.split(key, 3)
            bound = 1.0 / (d_in ** 0.5)
            w = jax.random.uniform(kw, (d_in, d_out), jnp.float32, -bound, bound)
            b = jax.random.uniform(kb, (d_out,), jnp.float32, -bound, bound)
            self.layer_params.append((w, b))

        # ---- Kernel parameter packs (one-time, lane-dense zero padding is numerically inert).
        self.in_pad = _round_up(input_dim, LANE)
        self.out1_pad = _round_up(dims[0][1], LANE)
        self.out_pad = _round_up(output_dim, LANE)
        self.num_pad = _round_up(n_numerical, SUBLANE) if n_numerical > 0 else 0
        self.vocab_pads = [_round_up(v, SUBLANE) for v in vocab_sizes]
        max_vocab = max(vocab_sizes) if n_categorical > 0 else 0
        self.use_fused = (n_categorical > 0) and (max_vocab <= self.FUSE_VOCAB_LIMIT)

        # Dense (fallback) pack: bf16 weights, f32 biases for every layer.
        dense = []
        for (w, b) in self.layer_params:
            d_in, d_out = w.shape
            ip, op = _round_up(d_in, LANE), _round_up(d_out, LANE)
            dense.append(jnp.pad(w.astype(compute_dtype), ((0, ip - d_in), (0, op - d_out))))
            dense.append(jnp.pad(b[None, :].astype(jnp.float32), ((0, 0), (0, op - d_out))))
        self.dense_param_arrays = dense

        # Fused pack: per-feature fused tables (emb_table @ W1_segment, computed in f32),
        # numerical segment of W1, b1, then the remaining layers from the dense pack.
        if self.use_fused:
            w1, b1 = self.layer_params[0]
            out1 = w1.shape[1]
            fused = []
            off = 0
            for i in range(n_categorical):
                d = emb_dims[i]
                seg = w1[off:off + d, :]                            # (emb_d, out1) f32
                T = self.embedding_tables[i] @ seg                  # (vocab_i, out1) f32
                fused.append(jnp.pad(T, ((0, self.vocab_pads[i] - vocab_sizes[i]),
                                         (0, self.out1_pad - out1))).astype(compute_dtype))
                off += d
            if n_numerical > 0:
                wn = w1[off:off + n_numerical, :]
                fused.append(jnp.pad(wn, ((0, self.num_pad - n_numerical),
                                          (0, self.out1_pad - out1))).astype(compute_dtype))
            fused.append(jnp.pad(b1[None, :].astype(jnp.float32),
                                 ((0, 0), (0, self.out1_pad - out1))))
            fused.extend(self.dense_param_arrays[2:])               # layers 2..L unchanged
            self.fused_param_arrays = fused
        else:
            self.fused_param_arrays = None

        self._tile_b_budget = self._compute_tile_budget()

    # ---- VMEM-derived tile budget (biggest batch tile that fits next to the resident params).
    def _compute_tile_budget(self):
        cap = _vmem_capacity_bytes()
        params = self.fused_param_arrays if self.use_fused else self.dense_param_arrays
        param_bytes = sum(a.size * a.dtype.itemsize for a in params)
        budget = cap - (16 << 20) - param_bytes - (2 << 20)
        max_pad = max([self.out_pad] + [a.shape[-1] for a in params])
        if self.use_fused:
            in_row = self.n_categorical * 4 + (self.num_pad * 2 if self.n_numerical > 0 else 0)
            onehot_row = sum(self.vocab_pads) * 2
        else:
            in_row = self.in_pad * 2
            onehot_row = 0
        per_row = 2 * in_row + 2 * self.out_pad * 2 + 2 * max_pad * 4 + onehot_row
        rows = max(budget, 0) // max(per_row, 1)
        return max(SUBLANE, min(1024, (rows // SUBLANE) * SUBLANE))

    def _choose_tile_b(self, B):
        B_aligned = _round_up(max(int(B), 1), SUBLANE)
        t = min(self.MAX_TILE_B, self._tile_b_budget, B_aligned)
        # Prefer >=2 grid steps (v7x 2 TCs) and ~4 steps for larger batches (DMA overlap).
        if B_aligned >= 4 * 128:
            t = min(t, _round_up((B_aligned + 3) // 4, SUBLANE))
        elif B_aligned >= 2 * SUBLANE:
            t = min(t, _round_up((B_aligned + 1) // 2, SUBLANE))
        return max(SUBLANE, (t // SUBLANE) * SUBLANE)

    def __call__(self, data, tile_b=None):
        # data: (B, n_categorical + n_numerical), float; categorical cols cast to int.
        B = data.shape[0]
        if tile_b is None:
            tile_b = self._choose_tile_b(B)
        else:
            tile_b = max(SUBLANE, _round_up(int(tile_b), SUBLANE))
        B_pad = _round_up(B, tile_b)

        if self.use_fused:
            # TODO(synk): PyTorch nn.Embedding raises on out-of-range indices; the fused
            #             one-hot path yields a zero contribution instead.
            cat = jnp.pad(data[:, : self.n_categorical].astype(jnp.int32),
                          ((0, B_pad - B), (0, 0)))
            num = None
            if self.n_numerical > 0:
                num = jnp.pad(data[:, self.n_categorical:].astype(self.compute_dtype),
                              ((0, B_pad - B), (0, self.num_pad - self.n_numerical)))
            out = _fused_forward(
                cat, num, self.fused_param_arrays,
                n_cat=self.n_categorical, has_num=self.n_numerical > 0,
                n_layers=self.n_layers, activation=self.activation,
                out_pad=self.out_pad, tile_b=tile_b, compute_dtype=self.compute_dtype)
        else:
            # Fallback (large vocab / no categorical features): wrapper-side gather + concat.
            cat = data[:, : self.n_categorical].astype(jnp.int32)
            embedded = [tbl[cat[:, i]] for i, tbl in enumerate(self.embedding_tables)]
            num = data[:, self.n_categorical:]
            x = jnp.concatenate(embedded + [num], axis=1)
            x = jnp.pad(x.astype(self.compute_dtype),
                        ((0, B_pad - B), (0, self.in_pad - self.input_dim)))
            out = _dense_forward(
                x, self.dense_param_arrays, n_layers=self.n_layers,
                activation=self.activation, out_pad=self.out_pad,
                tile_b=tile_b, compute_dtype=self.compute_dtype)

        return out[:B, : self.output_dim].astype(jnp.float32)

    def reference(self, data):
        """Pure-JAX f32 reference for correctness checking."""
        cat = data[:, : self.n_categorical].astype(jnp.int32)
        embedded = [tbl[cat[:, i]] for i, tbl in enumerate(self.embedding_tables)]
        num = data[:, self.n_categorical:]
        h = jnp.concatenate(embedded + [num], axis=1)
        act = _ACT[self.activation]
        for w, b in self.layer_params:
            h = act(h @ w + b)
        return h


if __name__ == "__main__":
    n_categorical = 3
    n_numerical = 4
    vocab_sizes = [5, 7, 11]
    emb_dims = [4, 4, 4]
    layer_dims = [32, 32]
    output_dim = 8

    model = BaseMLPPallas(n_categorical, n_numerical, vocab_sizes, emb_dims,
                          layer_dims, output_dim, activation="relu", seed=0)

    def make_data(key, batch):
        k_cat, k_num = jax.random.split(key)
        cat_cols = jax.random.randint(
            k_cat, (batch, n_categorical), 0, jnp.array(vocab_sizes, jnp.int32))
        num_cols = jax.random.normal(k_num, (batch, n_numerical), jnp.float32)
        return jnp.concatenate([cat_cols.astype(jnp.float32), num_cols], axis=1)

    # bf16 MXU feeds + bf16 output writeback vs f32 reference -> loosened tolerance.
    TOL = dict(atol=5e-2, rtol=5e-2)

    # Primary small-shape run (fused embedding+MLP kernel, single grid step).
    B = 8
    data = make_data(jax.random.PRNGKey(0), B)            # (8, 7)
    out = jax.block_until_ready(model(data))
    ref = model.reference(data)
    assert out.shape == (B, output_dim)
    assert jnp.allclose(out, ref, **TOL), float(jnp.max(jnp.abs(out - ref)))

    # Multi-step batch grid (exercises BlockSpec pipelining / parallel batch axis).
    B2 = 48
    data2 = make_data(jax.random.PRNGKey(1), B2)
    out2 = jax.block_until_ready(model(data2, tile_b=16))  # grid = 3 batch tiles
    ref2 = model.reference(data2)
    assert out2.shape == (B2, output_dim)
    assert jnp.allclose(out2, ref2, **TOL), float(jnp.max(jnp.abs(out2 - ref2)))

    # Dense fallback path (wrapper-side gather, used for large vocabularies).
    model_dense = BaseMLPPallas(n_categorical, n_numerical, vocab_sizes, emb_dims,
                                layer_dims, output_dim, activation="relu", seed=0)
    model_dense.use_fused = False
    out3 = jax.block_until_ready(model_dense(data2))
    assert out3.shape == (B2, output_dim)
    assert jnp.allclose(out3, ref2, **TOL), float(jnp.max(jnp.abs(out3 - ref2)))

    print("KERNEL_OK")
</pallas_src>

<mosaic_0001>
module attributes {stable_mosaic.version = 11 : i64} {
  func.func @kernel(%arg0: i32, %arg1: memref<16x3xi32, #tpu.memory_space<vmem>>, %arg2: memref<16x16xbf16, #tpu.memory_space<vmem>>, %arg3: memref<16x128xbf16, #tpu.memory_space<vmem>>, %arg4: memref<16x128xbf16, #tpu.memory_space<vmem>>, %arg5: memref<16x128xbf16, #tpu.memory_space<vmem>>, %arg6: memref<16x128xbf16, #tpu.memory_space<vmem>>, %arg7: memref<1x128xf32, #tpu.memory_space<vmem>>, %arg8: memref<128x128xbf16, #tpu.memory_space<vmem>>, %arg9: memref<1x128xf32, #tpu.memory_space<vmem>>, %arg10: memref<16x128xbf16, #tpu.memory_space<vmem>>) attributes {dimension_semantics = [#tpu.dimension_semantics<parallel>], iteration_bounds = array<i64: 1>, scalar_prefetch = 0 : i64, scratch_operands = 0 : i64, tpu.core_type = #tpu.core_type<tc>, window_params = [{transform_indices = @transform_0, window_bounds = array<i64: 16, 3>}, {transform_indices = @transform_1, window_bounds = array<i64: 16, 16>}, {pipeline_mode = #tpu.pipeline_mode<synchronous>, transform_indices = @transform_2, window_bounds = array<i64: 16, 128>}, {pipeline_mode = #tpu.pipeline_mode<synchronous>, transform_indices = @transform_3, window_bounds = array<i64: 16, 128>}, {pipeline_mode = #tpu.pipeline_mode<synchronous>, transform_indices = @transform_4, window_bounds = array<i64: 16, 128>}, {pipeline_mode = #tpu.pipeline_mode<synchronous>, transform_indices = @transform_5, window_bounds = array<i64: 16, 128>}, {pipeline_mode = #tpu.pipeline_mode<synchronous>, transform_indices = @transform_6, window_bounds = array<i64: 1, 128>}, {pipeline_mode = #tpu.pipeline_mode<synchronous>, transform_indices = @transform_7, window_bounds = array<i64: 128, 128>}, {pipeline_mode = #tpu.pipeline_mode<synchronous>, transform_indices = @transform_8, window_bounds = array<i64: 1, 128>}, {transform_indices = @transform_9, window_bounds = array<i64: 16, 128>}]} {
    %c0 = arith.constant 0 : index
    %c0_0 = arith.constant 0 : index
    %0 = vector.load %arg1[%c0, %c0_0] : memref<16x3xi32, #tpu.memory_space<vmem>>, vector<16x3xi32>
    %c0_1 = arith.constant 0 : index
    %c0_2 = arith.constant 0 : index
    %1 = vector.load %arg6[%c0_1, %c0_2] : memref<16x128xbf16, #tpu.memory_space<vmem>>, vector<16x128xbf16>
    %c0_3 = arith.constant 0 : index
    %c0_4 = arith.constant 0 : index
    %2 = vector.load %arg2[%c0_3, %c0_4] : memref<16x16xbf16, #tpu.memory_space<vmem>>, vector<16x16xbf16>
    %cst = arith.constant dense<0.000000e+00> : vector<16x128xf32>
    %3 = tpu.matmul %2, %1, %cst {dimension_numbers = #tpu.dot_dimension_numbers<[1], [0], [0], [1], [0, 0, 1, 1], [], []>} : vector<16x16xbf16>, vector<16x128xbf16>, vector<16x128xf32> -> vector<16x128xf32>
    %c0_5 = arith.constant 0 : index
    %c0_6 = arith.constant 0 : index
    %4 = vector.load %arg3[%c0_5, %c0_6] : memref<16x128xbf16, #tpu.memory_space<vmem>>, vector<16x128xbf16>
    %5 = tpu.iota {dimensions = array<i32: 1>} : vector<16x16xi32>
    %6 = vector.extract_strided_slice %0 {offsets = [0, 0], sizes = [16, 1], strides = [1, 1]} : vector<16x3xi32> to vector<16x1xi32>
    %7 = vector.broadcast %6 : vector<16x1xi32> to vector<16x16xi32>
    %8 = arith.cmpi eq, %7, %5 : vector<16x16xi32>
    %9 = arith.extui %8 : vector<16x16xi1> to vector<16x16xi32>
    %10 = arith.sitofp %9 : vector<16x16xi32> to vector<16x16xf32>
    %11 = arith.truncf %10 : vector<16x16xf32> to vector<16x16xbf16>
    %cst_7 = arith.constant dense<0.000000e+00> : vector<16x128xf32>
    %12 = tpu.matmul %11, %4, %cst_7 {dimension_numbers = #tpu.dot_dimension_numbers<[1], [0], [0], [1], [0, 0, 1, 1], [], []>} : vector<16x16xbf16>, vector<16x128xbf16>, vector<16x128xf32> -> vector<16x128xf32>
    %13 = arith.addf %3, %12 : vector<16x128xf32>
    %c0_8 = arith.constant 0 : index
    %c0_9 = arith.constant 0 : index
    %14 = vector.load %arg4[%c0_8, %c0_9] : memref<16x128xbf16, #tpu.memory_space<vmem>>, vector<16x128xbf16>
    %15 = tpu.iota {dimensions = array<i32: 1>} : vector<16x16xi32>
    %16 = vector.extract_strided_slice %0 {offsets = [0, 1], sizes = [16, 1], strides = [1, 1]} : vector<16x3xi32> to vector<16x1xi32>
    %17 = vector.broadcast %16 : vector<16x1xi32> to vector<16x16xi32>
    %18 = arith.cmpi eq, %17, %15 : vector<16x16xi32>
    %19 = arith.extui %18 : vector<16x16xi1> to vector<16x16xi32>
    %20 = arith.sitofp %19 : vector<16x16xi32> to vector<16x16xf32>
    %21 = arith.truncf %20 : vector<16x16xf32> to vector<16x16xbf16>
    %cst_10 = arith.constant dense<0.000000e+00> : vector<16x128xf32>
    %22 = tpu.matmul %21, %14, %cst_10 {dimension_numbers = #tpu.dot_dimension_numbers<[1], [0], [0], [1], [0, 0, 1, 1], [], []>} : vector<16x16xbf16>, vector<16x128xbf16>, vector<16x128xf32> -> vector<16x128xf32>
    %23 = arith.addf %13, %22 : vector<16x128xf32>
    %c0_11 = arith.constant 0 : index
    %c0_12 = arith.constant 0 : index
    %24 = vector.load %arg5[%c0_11, %c0_12] : memref<16x128xbf16, #tpu.memory_space<vmem>>, vector<16x128xbf16>
    %25 = tpu.iota {dimensions = array<i32: 1>} : vector<16x16xi32>
    %26 = vector.extract_strided_slice %0 {offsets = [0, 2], sizes = [16, 1], strides = [1, 1]} : vector<16x3xi32> to vector<16x1xi32>
    %27 = vector.broadcast %26 : vector<16x1xi32> to vector<16x16xi32>
    %28 = arith.cmpi eq, %27, %25 : vector<16x16xi32>
    %29 = arith.extui %28 : vector<16x16xi1> to vector<16x16xi32>
    %30 = arith.sitofp %29 : vector<16x16xi32> to vector<16x16xf32>
    %31 = arith.truncf %30 : vector<16x16xf32> to vector<16x16xbf16>
    %cst_13 = arith.constant dense<0.000000e+00> : vector<16x128xf32>
    %32 = tpu.matmul %31, %24, %cst_13 {dimension_numbers = #tpu.dot_dimension_numbers<[1], [0], [0], [1], [0, 0, 1, 1], [], []>} : vector<16x16xbf16>, vector<16x128xbf16>, vector<16x128xf32> -> vector<16x128xf32>
    %33 = arith.addf %23, %32 : vector<16x128xf32>
    %c0_14 = arith.constant 0 : index
    %c0_15 = arith.constant 0 : index
    %34 = vector.load %arg7[%c0_14, %c0_15] : memref<1x128xf32, #tpu.memory_space<vmem>>, vector<1x128xf32>
    %35 = vector.broadcast %34 : vector<1x128xf32> to vector<16x128xf32>
    %36 = arith.addf %33, %35 : vector<16x128xf32>
    %cst_16 = arith.constant 0.000000e+00 : f32
    %37 = vector.broadcast %cst_16 : f32 to vector<16x128xf32>
    %38 = arith.maximumf %36, %37 : vector<16x128xf32>
    %c0_17 = arith.constant 0 : index
    %c0_18 = arith.constant 0 : index
    %39 = vector.load %arg8[%c0_17, %c0_18] : memref<128x128xbf16, #tpu.memory_space<vmem>>, vector<128x128xbf16>
    %c0_19 = arith.constant 0 : index
    %c0_20 = arith.constant 0 : index
    %40 = vector.load %arg9[%c0_19, %c0_20] : memref<1x128xf32, #tpu.memory_space<vmem>>, vector<1x128xf32>
    %41 = arith.truncf %38 : vector<16x128xf32> to vector<16x128xbf16>
    %cst_21 = arith.constant dense<0.000000e+00> : vector<16x128xf32>
    %42 = tpu.matmul %41, %39, %cst_21 {dimension_numbers = #tpu.dot_dimension_numbers<[1], [0], [0], [1], [0, 0, 1, 1], [], []>} : vector<16x128xbf16>, vector<128x128xbf16>, vector<16x128xf32> -> vector<16x128xf32>
    %43 = vector.broadcast %40 : vector<1x128xf32> to vector<16x128xf32>
    %44 = arith.addf %42, %43 : vector<16x128xf32>
    %cst_22 = arith.constant 0.000000e+00 : f32
    %45 = vector.broadcast %cst_22 : f32 to vector<16x128xf32>
    %46 = arith.maximumf %44, %45 : vector<16x128xf32>
    %47 = arith.truncf %46 : vector<16x128xf32> to vector<16x128xbf16>
    %c0_23 = arith.constant 0 : index
    %c0_24 = arith.constant 0 : index
    %48 = vector.load %arg10[%c0_23, %c0_24] : memref<16x128xbf16, #tpu.memory_space<vmem>>, vector<16x128xbf16>
    tpu.vector_store %arg10[%c0_23, %c0_24], %47 {strides = array<i32>} : memref<16x128xbf16, #tpu.memory_space<vmem>>, vector<16x128xbf16>,
    return
  }
  func.func @transform_0(%arg0: i32) -> (i32, i32) {
    %c0_i32 = arith.constant 0 : i32
    %c0_i32_0 = arith.constant 0 : i32
    return %arg0, %c0_i32 : i32, i32
  }
  func.func @transform_1(%arg0: i32) -> (i32, i32) {
    %c0_i32 = arith.constant 0 : i32
    %c0_i32_0 = arith.constant 0 : i32
    return %arg0, %c0_i32 : i32, i32
  }
  func.func @transform_2(%arg0: i32) -> (i32, i32) {
    %c0_i32 = arith.constant 0 : i32
    %c0_i32_0 = arith.constant 0 : i32
    %c0_i32_1 = arith.constant 0 : i32
    return %c0_i32, %c0_i32_0 : i32, i32
  }
  func.func @transform_3(%arg0: i32) -> (i32, i32) {
    %c0_i32 = arith.constant 0 : i32
    %c0_i32_0 = arith.constant 0 : i32
    %c0_i32_1 = arith.constant 0 : i32
    return %c0_i32, %c0_i32_0 : i32, i32
  }
  func.func @transform_4(%arg0: i32) -> (i32, i32) {
    %c0_i32 = arith.constant 0 : i32
    %c0_i32_0 = arith.constant 0 : i32
    %c0_i32_1 = arith.constant 0 : i32
    return %c0_i32, %c0_i32_0 : i32, i32
  }
  func.func @transform_5(%arg0: i32) -> (i32, i32) {
    %c0_i32 = arith.constant 0 : i32
    %c0_i32_0 = arith.constant 0 : i32
    %c0_i32_1 = arith.constant 0 : i32
    return %c0_i32, %c0_i32_0 : i32, i32
  }
  func.func @transform_6(%arg0: i32) -> (i32, i32) {
    %c0_i32 = arith.constant 0 : i32
    %c0_i32_0 = arith.constant 0 : i32
    %c0_i32_1 = arith.constant 0 : i32
    return %c0_i32, %c0_i32_0 : i32, i32
  }
  func.func @transform_7(%arg0: i32) -> (i32, i32) {
    %c0_i32 = arith.constant 0 : i32
    %c0_i32_0 = arith.constant 0 : i32
    %c0_i32_1 = arith.constant 0 : i32
    return %c0_i32, %c0_i32_0 : i32, i32
  }
  func.func @transform_8(%arg0: i32) -> (i32, i32) {
    %c0_i32 = arith.constant 0 : i32
    %c0_i32_0 = arith.constant 0 : i32
    %c0_i32_1 = arith.constant 0 : i32
    return %c0_i32, %c0_i32_0 : i32, i32
  }
  func.func @transform_9(%arg0: i32) -> (i32, i32) {
    %c0_i32 = arith.constant 0 : i32
    %c0_i32_0 = arith.constant 0 : i32
    return %arg0, %c0_i32 : i32, i32
  }
}

module attributes {stable_mosaic.version = 11 : i64} {
  func.func @kernel(%arg0: i32, %arg1: memref<16x3xi32, #tpu.memory_space<vmem>>, %arg2: memref<16x16xbf16, #tpu.memory_space<vmem>>, %arg3: memref<16x128xbf16, #tpu.memory_space<vmem>>, %arg4: memref<16x128xbf16, #tpu.memory_space<vmem>>, %arg5: memref<16x128xbf16, #tpu.memory_space<vmem>>, %arg6: memref<16x128xbf16, #tpu.memory_space<vmem>>, %arg7: memref<1x128xf32, #tpu.memory_space<vmem>>, %arg8: memref<128x128xbf16, #tpu.memory_space<vmem>>, %arg9: memref<1x128xf32, #tpu.memory_space<vmem>>, %arg10: memref<16x128xbf16, #tpu.memory_space<vmem>>) attributes {dimension_semantics = [#tpu.dimension_semantics<parallel>], iteration_bounds = array<i64: 1>, scalar_prefetch = 0 : i64, scratch_operands = 0 : i64, tpu.core_type = #tpu.core_type<tc>, window_params = [{transform_indices = @transform_0, window_bounds = array<i64: 16, 3>}, {transform_indices = @transform_1, window_bounds = array<i64: 16, 16>}, {pipeline_mode = #tpu.pipeline_mode<synchronous>, transform_indices = @transform_2, window_bounds = array<i64: 16, 128>}, {pipeline_mode = #tpu.pipeline_mode<synchronous>, transform_indices = @transform_3, window_bounds = array<i64: 16, 128>}, {pipeline_mode = #tpu.pipeline_mode<synchronous>, transform_indices = @transform_4, window_bounds = array<i64: 16, 128>}, {pipeline_mode = #tpu.pipeline_mode<synchronous>, transform_indices = @transform_5, window_bounds = array<i64: 16, 128>}, {pipeline_mode = #tpu.pipeline_mode<synchronous>, transform_indices = @transform_6, window_bounds = array<i64: 1, 128>}, {pipeline_mode = #tpu.pipeline_mode<synchronous>, transform_indices = @transform_7, window_bounds = array<i64: 128, 128>}, {pipeline_mode = #tpu.pipeline_mode<synchronous>, transform_indices = @transform_8, window_bounds = array<i64: 1, 128>}, {transform_indices = @transform_9, window_bounds = array<i64: 16, 128>}]} {
    %c0 = arith.constant 0 : index
    %c0_0 = arith.constant 0 : index
    %0 = vector.load %arg1[%c0, %c0_0] : memref<16x3xi32, #tpu.memory_space<vmem>>, vector<16x3xi32>
    %c0_1 = arith.constant 0 : index
    %c0_2 = arith.constant 0 : index
    %1 = vector.load %arg6[%c0_1, %c0_2] : memref<16x128xbf16, #tpu.memory_space<vmem>>, vector<16x128xbf16>
    %c0_3 = arith.constant 0 : index
    %c0_4 = arith.constant 0 : index
    %2 = vector.load %arg2[%c0_3, %c0_4] : memref<16x16xbf16, #tpu.memory_space<vmem>>, vector<16x16xbf16>
    %cst = arith.constant dense<0.000000e+00> : vector<16x128xf32>
    %3 = tpu.matmul %2, %1, %cst {dimension_numbers = #tpu.dot_dimension_numbers<[1], [0], [0], [1], [0, 0, 1, 1], [], []>} : vector<16x16xbf16>, vector<16x128xbf16>, vector<16x128xf32> -> vector<16x128xf32>
    %c0_5 = arith.constant 0 : index
    %c0_6 = arith.constant 0 : index
    %4 = vector.load %arg3[%c0_5, %c0_6] : memref<16x128xbf16, #tpu.memory_space<vmem>>, vector<16x128xbf16>
    %5 = tpu.iota {dimensions = array<i32: 1>} : vector<16x16xi32>
    %6 = vector.extract_strided_slice %0 {offsets = [0, 0], sizes = [16, 1], strides = [1, 1]} : vector<16x3xi32> to vector<16x1xi32>
    %7 = vector.broadcast %6 : vector<16x1xi32> to vector<16x16xi32>
    %8 = arith.cmpi eq, %7, %5 : vector<16x16xi32>
    %9 = arith.extui %8 : vector<16x16xi1> to vector<16x16xi32>
    %10 = arith.sitofp %9 : vector<16x16xi32> to vector<16x16xf32>
    %11 = arith.truncf %10 : vector<16x16xf32> to vector<16x16xbf16>
    %cst_7 = arith.constant dense<0.000000e+00> : vector<16x128xf32>
    %12 = tpu.matmul %11, %4, %cst_7 {dimension_numbers = #tpu.dot_dimension_numbers<[1], [0], [0], [1], [0, 0, 1, 1], [], []>} : vector<16x16xbf16>, vector<16x128xbf16>, vector<16x128xf32> -> vector<16x128xf32>
    %13 = arith.addf %3, %12 : vector<16x128xf32>
    %c0_8 = arith.constant 0 : index
    %c0_9 = arith.constant 0 : index
    %14 = vector.load %arg4[%c0_8, %c0_9] : memref<16x128xbf16, #tpu.memory_space<vmem>>, vector<16x128xbf16>
    %15 = tpu.iota {dimensions = array<i32: 1>} : vector<16x16xi32>
    %16 = vector.extract_strided_slice %0 {offsets = [0, 1], sizes = [16, 1], strides = [1, 1]} : vector<16x3xi32> to vector<16x1xi32>
    %17 = vector.broadcast %16 : vector<16x1xi32> to vector<16x16xi32>
    %18 = arith.cmpi eq, %17, %15 : vector<16x16xi32>
    %19 = arith.extui %18 : vector<16x16xi1> to vector<16x16xi32>
    %20 = arith.sitofp %19 : vector<16x16xi32> to vector<16x16xf32>
    %21 = arith.truncf %20 : vector<16x16xf32> to vector<16x16xbf16>
    %cst_10 = arith.constant dense<0.000000e+00> : vector<16x128xf32>
    %22 = tpu.matmul %21, %14, %cst_10 {dimension_numbers = #tpu.dot_dimension_numbers<[1], [0], [0], [1], [0, 0, 1, 1], [], []>} : vector<16x16xbf16>, vector<16x128xbf16>, vector<16x128xf32> -> vector<16x128xf32>
    %23 = arith.addf %13, %22 : vector<16x128xf32>
    %c0_11 = arith.constant 0 : index
    %c0_12 = arith.constant 0 : index
    %24 = vector.load %arg5[%c0_11, %c0_12] : memref<16x128xbf16, #tpu.memory_space<vmem>>, vector<16x128xbf16>
    %25 = tpu.iota {dimensions = array<i32: 1>} : vector<16x16xi32>
    %26 = vector.extract_strided_slice %0 {offsets = [0, 2], sizes = [16, 1], strides = [1, 1]} : vector<16x3xi32> to vector<16x1xi32>
    %27 = vector.broadcast %26 : vector<16x1xi32> to vector<16x16xi32>
    %28 = arith.cmpi eq, %27, %25 : vector<16x16xi32>
    %29 = arith.extui %28 : vector<16x16xi1> to vector<16x16xi32>
    %30 = arith.sitofp %29 : vector<16x16xi32> to vector<16x16xf32>
    %31 = arith.truncf %30 : vector<16x16xf32> to vector<16x16xbf16>
    %cst_13 = arith.constant dense<0.000000e+00> : vector<16x128xf32>
    %32 = tpu.matmul %31, %24, %cst_13 {dimension_numbers = #tpu.dot_dimension_numbers<[1], [0], [0], [1], [0, 0, 1, 1], [], []>} : vector<16x16xbf16>, vector<16x128xbf16>, vector<16x128xf32> -> vector<16x128xf32>
    %33 = arith.addf %23, %32 : vector<16x128xf32>
    %c0_14 = arith.constant 0 : index
    %c0_15 = arith.constant 0 : index
    %34 = vector.load %arg7[%c0_14, %c0_15] : memref<1x128xf32, #tpu.memory_space<vmem>>, vector<1x128xf32>
    %35 = vector.broadcast %34 : vector<1x128xf32> to vector<16x128xf32>
    %36 = arith.addf %33, %35 : vector<16x128xf32>
    %cst_16 = arith.constant 0.000000e+00 : f32
    %37 = vector.broadcast %cst_16 : f32 to vector<16x128xf32>
    %38 = arith.maximumf %36, %37 : vector<16x128xf32>
    %c0_17 = arith.constant 0 : index
    %c0_18 = arith.constant 0 : index
    %39 = vector.load %arg8[%c0_17, %c0_18] : memref<128x128xbf16, #tpu.memory_space<vmem>>, vector<128x128xbf16>
    %c0_19 = arith.constant 0 : index
    %c0_20 = arith.constant 0 : index
    %40 = vector.load %arg9[%c0_19, %c0_20] : memref<1x128xf32, #tpu.memory_space<vmem>>, vector<1x128xf32>
    %41 = arith.truncf %38 : vector<16x128xf32> to vector<16x128xbf16>
    %cst_21 = arith.constant dense<0.000000e+00> : vector<16x128xf32>
    %42 = tpu.matmul %41, %39, %cst_21 {dimension_numbers = #tpu.dot_dimension_numbers<[1], [0], [0], [1], [0, 0, 1, 1], [], []>} : vector<16x128xbf16>, vector<128x128xbf16>, vector<16x128xf32> -> vector<16x128xf32>
    %43 = vector.broadcast %40 : vector<1x128xf32> to vector<16x128xf32>
    %44 = arith.addf %42, %43 : vector<16x128xf32>
    %cst_22 = arith.constant 0.000000e+00 : f32
    %45 = vector.broadcast %cst_22 : f32 to vector<16x128xf32>
    %46 = arith.maximumf %44, %45 : vector<16x128xf32>
    %47 = arith.truncf %46 : vector<16x128xf32> to vector<16x128xbf16>
    %c0_23 = arith.constant 0 : index
    %c0_24 = arith.constant 0 : index
    %48 = vector.load %arg10[%c0_23, %c0_24] : memref<16x128xbf16, #tpu.memory_space<vmem>>, vector<16x128xbf16>
    tpu.vector_store %arg10[%c0_23, %c0_24], %47 {strides = array<i32>} : memref<16x128xbf16, #tpu.memory_space<vmem>>, vector<16x128xbf16>,
    return
  }
  func.func @transform_0(%arg0: i32) -> (i32, i32) {
    %c0_i32 = arith.constant 0 : i32
    %c0_i32_0 = arith.constant 0 : i32
    return %arg0, %c0_i32 : i32, i32
  }
  func.func @transform_1(%arg0: i32) -> (i32, i32) {
    %c0_i32 = arith.constant 0 : i32
    %c0_i32_0 = arith.constant 0 : i32
    return %arg0, %c0_i32 : i32, i32
  }
  func.func @transform_2(%arg0: i32) -> (i32, i32) {
    %c0_i32 = arith.constant 0 : i32
    %c0_i32_0 = arith.constant 0 : i32
    %c0_i32_1 = arith.constant 0 : i32
    return %c0_i32, %c0_i32_0 : i32, i32
  }
  func.func @transform_3(%arg0: i32) -> (i32, i32) {
    %c0_i32 = arith.constant 0 : i32
    %c0_i32_0 = arith.constant 0 : i32
    %c0_i32_1 = arith.constant 0 : i32
    return %c0_i32, %c0_i32_0 : i32, i32
  }
  func.func @transform_4(%arg0: i32) -> (i32, i32) {
    %c0_i32 = arith.constant 0 : i32
    %c0_i32_0 = arith.constant 0 : i32
    %c0_i32_1 = arith.constant 0 : i32
    return %c0_i32, %c0_i32_0 : i32, i32
  }
  func.func @transform_5(%arg0: i32) -> (i32, i32) {
    %c0_i32 = arith.constant 0 : i32
    %c0_i32_0 = arith.constant 0 : i32
    %c0_i32_1 = arith.constant 0 : i32
    return %c0_i32, %c0_i32_0 : i32, i32
  }
  func.func @transform_6(%arg0: i32) -> (i32, i32) {
    %c0_i32 = arith.constant 0 : i32
    %c0_i32_0 = arith.constant 0 : i32
    %c0_i32_1 = arith.constant 0 : i32
    return %c0_i32, %c0_i32_0 : i32, i32
  }
  func.func @transform_7(%arg0: i32) -> (i32, i32) {
    %c0_i32 = arith.constant 0 : i32
    %c0_i32_0 = arith.constant 0 : i32
    %c0_i32_1 = arith.constant 0 : i32
    return %c0_i32, %c0_i32_0 : i32, i32
  }
  func.func @transform_8(%arg0: i32) -> (i32, i32) {
    %c0_i32 = arith.constant 0 : i32
    %c0_i32_0 = arith.constant 0 : i32
    %c0_i32_1 = arith.constant 0 : i32
    return %c0_i32, %c0_i32_0 : i32, i32
  }
  func.func @transform_9(%arg0: i32) -> (i32, i32) {
    %c0_i32 = arith.constant 0 : i32
    %c0_i32_0 = arith.constant 0 : i32
    return %arg0, %c0_i32 : i32, i32
  }
}

</mosaic_0001>

<llo_original>
// kernel: tpu_custom_call.1
$region0: #{tpu_custom_call.1}
  #allocation0 [shape = 'u32[]', space=smem, size = 0x4, offset = 0x4, fixed_abs, tag = 'smem constant byte address 0x4 - core index']
  #allocation1 [shape = 'u32[144,128]{1,0:T(1,128)}', space=vmem, size = 0x12000, scoped, tag = 'internal scratch']
  %s0 = inlined_call_operand.vmem [shape: s32[16,3], index: 0, kind: input, shape index: {}]
  %s1 = inlined_call_operand.vmem [shape: bf16[16,16], index: 1, kind: input, shape index: {}]
  %s2 = inlined_call_operand.vmem [shape: bf16[16,128], index: 2, kind: input, shape index: {}]
  %s3 = inlined_call_operand.vmem [shape: bf16[16,128], index: 3, kind: input, shape index: {}]
  %s4 = inlined_call_operand.vmem [shape: bf16[16,128], index: 4, kind: input, shape index: {}]
  %s5 = inlined_call_operand.hbm [shape: bf16[16,128], index: 5, kind: input, shape index: {}]
  %s6 = inlined_call_operand.vmem [shape: f32[1,128], index: 6, kind: input, shape index: {}]
  %s7 = inlined_call_operand.hbm [shape: bf16[128,128], index: 7, kind: input, shape index: {}]
  %s8 = inlined_call_operand.vmem [shape: f32[1,128], index: 8, kind: input, shape index: {}]
  %s9 = inlined_call_operand.hbm [shape: bf16[16,128], index: 9, kind: output, shape index: {}]
  %s10 = sld [smem:[#allocation0]]
  $region54: #{tpu_custom_call.1} parent=0
    _
  %s12 = ssub.s32 1, %s10
  %s13 = scalar_select 0, %s12, %s10
  $region1: #{tpu_custom_call.1} parent=0
    #allocation2 [shape = 'u8[4096]{0}', space=vmem, size = 0x1000, scoped, tag = 'input window, operand 5, single buffered']
    #allocation3 [shape = 's32[1]{0}', space=sflag, size = 0x4, scoped, tag = 'scoped memory for tpu_custom_call.1']
    #allocation4 [shape = 's32[1]{0}', space=sflag, size = 0x4, scoped, tag = 'scoped memory for tpu_custom_call.1']
    #allocation5 [shape = 'u8[32768]{0}', space=vmem, size = 0x8000, scoped, tag = 'input window, operand 7, single buffered']
    #allocation6 [shape = 's32[1]{0}', space=sflag, size = 0x4, scoped, tag = 'scoped memory for tpu_custom_call.1']
    #allocation7 [shape = 'u8[4096]{0}', space=vmem, size = 0x1000, scoped, tag = 'output window, operand 0, single buffered']
    %14 = vsyncpa [#allocation3], 0
    %15 = vsyncpa [#allocation6], 0
    %16 = vsyncpa [#allocation4], 0
    // Predicated region
    $region2: #{tpu_custom_call.1} parent=1 // pred_check
      _
    $region3: #{tpu_custom_call.1} parent=1 // pred_check_branch
      %18 = sbr.rel (0) target = $region5
    $region4: #{tpu_custom_call.1} parent=1 // pred_region
      _
    $region5: #{tpu_custom_call.1} parent=1 // pred_fallthru
      _
    // Predicated region
    $region6: #{tpu_custom_call.1} parent=1 // pred_check
      _
    $region7: #{tpu_custom_call.1} parent=1 // pred_check_branch
      %20 = sbr.rel (0) target = $region9
    $region8: #{tpu_custom_call.1} parent=1 // pred_region
      _
    $region9: #{tpu_custom_call.1} parent=1 // pred_fallthru
      _
    // Predicated region
    $region10: #{tpu_custom_call.1} parent=1 // pred_check
      _
    $region11: #{tpu_custom_call.1} parent=1 // pred_check_branch
      %22 = sbr.rel (0) target = $region13
    $region12: #{tpu_custom_call.1} parent=1 // pred_region
      _
    $region13: #{tpu_custom_call.1} parent=1 // pred_fallthru
      _
    // Predicated region
    $region14: #{tpu_custom_call.1} parent=1 // pred_check
      _
    $region15: #{tpu_custom_call.1} parent=1 // pred_check_branch
      %24 = sbr.rel (0) target = $region17
    $region16: #{tpu_custom_call.1} parent=1 // pred_region
      _
    $region17: #{tpu_custom_call.1} parent=1 // pred_fallthru
      _
    // Predicated region
    $region18: #{tpu_custom_call.1} parent=1 // pred_check
      _
    $region19: #{tpu_custom_call.1} parent=1 // pred_check_branch
      %26 = sbr.rel (0) target = $region21
    $region20: #{tpu_custom_call.1} parent=1 // pred_region
      _
    $region21: #{tpu_custom_call.1} parent=1 // pred_fallthru
      _
    // Predicated region
    $region22: #{tpu_custom_call.1} parent=1 // pred_check
      _
    $region23: #{tpu_custom_call.1} parent=1 // pred_check_branch
      %28 = sbr.rel (0) target = $region25
    $region24: #{tpu_custom_call.1} parent=1 // pred_region
      %s30 = ssub.s32 128, 128
      %31 = vsyncadd [#allocation3], %s30
      %s32 = sshll.u32 [#allocation2], 4
      %s33 = int_to_ptr.vmem [resolvable:$true] %s32
      %38 = dma.hbm_to_vmem [thread:$0]  %s5, 128, %s33, [#allocation3], 64, 64, 4
    $region25: #{tpu_custom_call.1} parent=1 // pred_fallthru
      _
    // Predicated region
    $region26: #{tpu_custom_call.1} parent=1 // pred_check
      _
    $region27: #{tpu_custom_call.1} parent=1 // pred_check_branch
      %40 = sbr.rel (0) target = $region29
    $region28: #{tpu_custom_call.1} parent=1 // pred_region
      _
    $region29: #{tpu_custom_call.1} parent=1 // pred_fallthru
      _
    // Predicated region
    $region30: #{tpu_custom_call.1} parent=1 // pred_check
      _
    $region31: #{tpu_custom_call.1} parent=1 // pred_check_branch
      %42 = sbr.rel (0) target = $region33
    $region32: #{tpu_custom_call.1} parent=1 // pred_region
      %s44 = ssub.s32 1024, 1024
      %45 = vsyncadd [#allocation6], %s44
      %s46 = sshll.u32 [#allocation5], 4
      %s47 = int_to_ptr.vmem [resolvable:$true] %s46
      %52 = dma.hbm_to_vmem [thread:$0]  %s7, 1024, %s47, [#allocation6], 64, 64, 4
    $region33: #{tpu_custom_call.1} parent=1 // pred_fallthru
      _
    // Predicated region
    $region34: #{tpu_custom_call.1} parent=1 // pred_check
      _
    $region35: #{tpu_custom_call.1} parent=1 // pred_check_branch
      %54 = sbr.rel (0) target = $region37
    $region36: #{tpu_custom_call.1} parent=1 // pred_region
      _
    $region37: #{tpu_custom_call.1} parent=1 // pred_fallthru
      _
    // Predicated region
    $region38: #{tpu_custom_call.1} parent=1 // pred_check
      _
    $region39: #{tpu_custom_call.1} parent=1 // pred_check_branch
      %56 = sbr.rel (0) target = $region41
    $region40: #{tpu_custom_call.1} parent=1 // pred_region
      %57 = dma.done [#allocation3], 128
    $region41: #{tpu_custom_call.1} parent=1 // pred_fallthru
      _
    // Predicated region
    $region42: #{tpu_custom_call.1} parent=1 // pred_check
      _
    $region43: #{tpu_custom_call.1} parent=1 // pred_check_branch
      %59 = sbr.rel (0) target = $region45
    $region44: #{tpu_custom_call.1} parent=1 // pred_region
      %60 = dma.done [#allocation6], 1024
    $region45: #{tpu_custom_call.1} parent=1 // pred_fallthru
      _
    %v62 = vld [vmem:[%s0] sm:$0xff]
    %v63 = vld [vmem:[%s0 + $0x8] sm:$0xff]
    %v64 = vld [vmem:[#allocation2] sm:$0xf]
    %v65 = vld [vmem:[#allocation2 + $0x4] sm:$0xf]
    %v66 = vld [vmem:[%s1] sm:$0xf]
    %v67 = vld [vmem:[%s1 + $0x4] sm:$0xf]
    %v68 = vld [vmem:[%s2] sm:$0xf]
    %v69 = vld [vmem:[%s2 + $0x4] sm:$0xf]
    %v70 = vlaneseq
    %v71 = vand.u32 %v70, 127
    %72 = vset.pattern.permute.xlu0 0
    %73 = vperm.xlu0 %72, %v62
    %v74 = vpop.permute.xlu0 %73
    %75 = vset.pattern.permute.xlu0 0
    %76 = vperm.xlu0 %75, %v63
    %v77 = vpop.permute.xlu0 %76
    %vm78 = vcmp.eq.s32.totalorder %v74, %v71
    %vm79 = vcmp.eq.s32.totalorder %v77, %v71
    %v80 = vsel %vm78, 1, 0
    %v81 = vsel %vm79, 1, 0
    %v82 = vcvt.s32.f32 %v80
    %v83 = vcvt.s32.f32 %v81
    %v84 = vpack.c.bf16 %v83, %v82
    %v87 = vunpack.c.l.b16 %v68
    %v88 = vunpack.c.l.b16 %v69
    %v89 = vpack.c.b16 %v88, %v87
    %vm91 = vcmask 130048
    %v93 = vsel %vm91, %v84, 0
    %95 = vmatprep.subr.bf16.mxu0 0
    %96 = vmatpush1.bf16.msra.mxu0 %v89
    %97 = vmatprep.subr.bf16.mxu0 0
    %98 = vmatpush1.bf16.msra.mxu0 0
    %99 = vmatprep.subr.bf16.mxu0 0
    %100 = vmatpush1.bf16.msra.mxu0 0
    %101 = vmatprep.subr.bf16.mxu0 0
    %102 = vmatpush1.bf16.msra.mxu0 0
    %103 = vmatprep.subr.bf16.mxu0 0
    %104 = vmatpush1.bf16.msra.mxu0 0
    %105 = vmatprep.subr.bf16.mxu0 0
    %106 = vmatpush1.bf16.msra.mxu0 0
    %107 = vmatprep.subr.bf16.mxu0 0
    %108 = vmatpush1.bf16.msra.mxu0 0
    %109 = vmatprep.subr.bf16.mxu0 0
    %110 = vmatpush1.bf16.msra.mxu0 0
    %111 = vmatprep.subr.bf16.mxu0 0
    %112 = vmatpush1.bf16.msra.mxu0 0
    %113 = vmatprep.subr.bf16.mxu0 0
    %114 = vmatpush1.bf16.msra.mxu0 0
    %115 = vmatprep.subr.bf16.mxu0 0
    %116 = vmatpush1.bf16.msra.mxu0 0
    %117 = vmatprep.subr.bf16.mxu0 0
    %118 = vmatpush1.bf16.msra.mxu0 0
    %119 = vmatprep.subr.bf16.mxu0 0
    %120 = vmatpush1.bf16.msra.mxu0 0
    %121 = vmatprep.subr.bf16.mxu0 0
    %122 = vmatpush1.bf16.msra.mxu0 0
    %123 = vmatprep.subr.bf16.mxu0 0
    %124 = vmatpush1.bf16.msra.mxu0 0
    %125 = vmatprep.subr.bf16.mxu0 0
    %126 = vmatpush1.bf16.msra.mxu0 0
    %127 = vmatprep.mubr.bf16.mxu0 0
    %128 = vmatmul.mubr.bf16.gmra.mrb[0].mxu0 %v93
    %v129 = vpop.f32.mrb[0].mxu0
    %v130 = vadd.f32 0.0, %v129
    %v131 = vpop.f32.mrb[0].mxu0
    %v132 = vpop.f32.mrb[0].mxu0
    %v133 = vadd.f32 0.0, %v132
    %v134 = vpop.f32.mrb[0].mxu0
    %135 = vdwg.mxu0
    %v138 = vunpack.c.l.b16 %v66
    %v139 = vunpack.c.l.b16 %v67
    %v140 = vpack.c.b16 %v139, %v138
    %v143 = vunpack.c.l.b16 %v64
    %v144 = vunpack.c.l.b16 %v65
    %v145 = vpack.c.b16 %v144, %v143
    %v148 = vsel %vm91, %v140, 0
    %150 = vmatprep.subr.bf16.mxu0 0
    %151 = vmatpush1.bf16.msra.mxu0 %v145
    %152 = vmatprep.subr.bf16.mxu0 0
    %153 = vmatpush1.bf16.msra.mxu0 0
    %154 = vmatprep.subr.bf16.mxu0 0
    %155 = vmatpush1.bf16.msra.mxu0 0
    %156 = vmatprep.subr.bf16.mxu0 0
    %157 = vmatpush1.bf16.msra.mxu0 0
    %158 = vmatprep.subr.bf16.mxu0 0
    %159 = vmatpush1.bf16.msra.mxu0 0
    %160 = vmatprep.subr.bf16.mxu0 0
    %161 = vmatpush1.bf16.msra.mxu0 0
    %162 = vmatprep.subr.bf16.mxu0 0
    %163 = vmatpush1.bf16.msra.mxu0 0
    %164 = vmatprep.subr.bf16.mxu0 0
    %165 = vmatpush1.bf16.msra.mxu0 0
    %166 = vmatprep.subr.bf16.mxu0 0
    %167 = vmatpush1.bf16.msra.mxu0 0
    %168 = vmatprep.subr.bf16.mxu0 0
    %169 = vmatpush1.bf16.msra.mxu0 0
    %170 = vmatprep.subr.bf16.mxu0 0
    %171 = vmatpush1.bf16.msra.mxu0 0
    %172 = vmatprep.subr.bf16.mxu0 0
    %173 = vmatpush1.bf16.msra.mxu0 0
    %174 = vmatprep.subr.bf16.mxu0 0
    %175 = vmatpush1.bf16.msra.mxu0 0
    %176 = vmatprep.subr.bf16.mxu0 0
    %177 = vmatpush1.bf16.msra.mxu0 0
    %178 = vmatprep.subr.bf16.mxu0 0
    %179 = vmatpush1.bf16.msra.mxu0 0
    %180 = vmatprep.subr.bf16.mxu0 0
    %181 = vmatpush1.bf16.msra.mxu0 0
    %182 = vmatprep.mubr.bf16.mxu0 0
    %183 = vmatmul.mubr.bf16.gmra.mrb[0].mxu0 %v148
    %v184 = vpop.f32.mrb[0].mxu0
    %v185 = vadd.f32 %v130, %v184
    %v186 = vpop.f32.mrb[0].mxu0
    %v187 = vpop.f32.mrb[0].mxu0
    %v188 = vadd.f32 %v133, %v187
    %v189 = vpop.f32.mrb[0].mxu0
    %190 = vdwg.mxu0
    %v191 = vld [vmem:[%s3] sm:$0xf]
    %v192 = vld [vmem:[%s3 + $0x4] sm:$0xf]
    %193 = vset.pattern.permute.xlu0 1
    %194 = vperm.xlu0 %193, %v62
    %v195 = vpop.permute.xlu0 %194
    %196 = vset.pattern.permute.xlu0 1
    %197 = vperm.xlu0 %196, %v63
    %v198 = vpop.permute.xlu0 %197
    %vm199 = vcmp.eq.s32.totalorder %v195, %v71
    %vm200 = vcmp.eq.s32.totalorder %v198, %v71
    %v201 = vsel %vm199, 1, 0
    %v202 = vsel %vm200, 1, 0
    %v203 = vcvt.s32.f32 %v201
    %v204 = vcvt.s32.f32 %v202
    %v205 = vpack.c.bf16 %v204, %v203
    %v208 = vunpack.c.l.b16 %v191
    %v209 = vunpack.c.l.b16 %v192
    %v210 = vpack.c.b16 %v209, %v208
    %v213 = vsel %vm91, %v205, 0
    %215 = vmatprep.subr.bf16.mxu0 0
    %216 = vmatpush1.bf16.msra.mxu0 %v210
    %217 = vmatprep.subr.bf16.mxu0 0
    %218 = vmatpush1.bf16.msra.mxu0 0
    %219 = vmatprep.subr.bf16.mxu0 0
    %220 = vmatpush1.bf16.msra.mxu0 0
    %221 = vmatprep.subr.bf16.mxu0 0
    %222 = vmatpush1.bf16.msra.mxu0 0
    %223 = vmatprep.subr.bf16.mxu0 0
    %224 = vmatpush1.bf16.msra.mxu0 0
    %225 = vmatprep.subr.bf16.mxu0 0
    %226 = vmatpush1.bf16.msra.mxu0 0
    %227 = vmatprep.subr.bf16.mxu0 0
    %228 = vmatpush1.bf16.msra.mxu0 0
    %229 = vmatprep.subr.bf16.mxu0 0
    %230 = vmatpush1.bf16.msra.mxu0 0
    %231 = vmatprep.subr.bf16.mxu0 0
    %232 = vmatpush1.bf16.msra.mxu0 0
    %233 = vmatprep.subr.bf16.mxu0 0
    %234 = vmatpush1.bf16.msra.mxu0 0
    %235 = vmatprep.subr.bf16.mxu0 0
    %236 = vmatpush1.bf16.msra.mxu0 0
    %237 = vmatprep.subr.bf16.mxu0 0
    %238 = vmatpush1.bf16.msra.mxu0 0
    %239 = vmatprep.subr.bf16.mxu0 0
    %240 = vmatpush1.bf16.msra.mxu0 0
    %241 = vmatprep.subr.bf16.mxu0 0
    %242 = vmatpush1.bf16.msra.mxu0 0
    %243 = vmatprep.subr.bf16.mxu0 0
    %244 = vmatpush1.bf16.msra.mxu0 0
    %245 = vmatprep.subr.bf16.mxu0 0
    %246 = vmatpush1.bf16.msra.mxu0 0
    %247 = vmatprep.mubr.bf16.mxu0 0
    %248 = vmatmul.mubr.bf16.gmra.mrb[0].mxu0 %v213
    %v249 = vpop.f32.mrb[0].mxu0
    %v250 = vadd.f32 0.0, %v249
    %v251 = vpop.f32.mrb[0].mxu0
    %v252 = vpop.f32.mrb[0].mxu0
    %v253 = vadd.f32 0.0, %v252
    %v254 = vpop.f32.mrb[0].mxu0
    %255 = vdwg.mxu0
    %v256 = vadd.f32 %v185, %v250
    %v257 = vadd.f32 %v188, %v253
    %v258 = vld [vmem:[%s4] sm:$0xf]
    %v259 = vld [vmem:[%s4 + $0x4] sm:$0xf]
    %260 = vset.pattern.permute.xlu0 2
    %261 = vperm.xlu0 %260, %v62
    %v262 = vpop.permute.xlu0 %261
    %263 = vset.pattern.permute.xlu0 2
    %264 = vperm.xlu0 %263, %v63
    %v265 = vpop.permute.xlu0 %264
    %vm266 = vcmp.eq.s32.totalorder %v262, %v71
    %vm267 = vcmp.eq.s32.totalorder %v265, %v71
    %v268 = vsel %vm266, 1, 0
    %v269 = vsel %vm267, 1, 0
    %v270 = vcvt.s32.f32 %v268
    %v271 = vcvt.s32.f32 %v269
    %v272 = vpack.c.bf16 %v271, %v270
    %v275 = vunpack.c.l.b16 %v258
    %v276 = vunpack.c.l.b16 %v259
    %v277 = vpack.c.b16 %v276, %v275
    %v280 = vsel %vm91, %v272, 0
    %282 = vmatprep.subr.bf16.mxu0 0
    %283 = vmatpush1.bf16.msra.mxu0 %v277
    %284 = vmatprep.subr.bf16.mxu0 0
    %285 = vmatpush1.bf16.msra.mxu0 0
    %286 = vmatprep.subr.bf16.mxu0 0
    %287 = vmatpush1.bf16.msra.mxu0 0
    %288 = vmatprep.subr.bf16.mxu0 0
    %289 = vmatpush1.bf16.msra.mxu0 0
    %290 = vmatprep.subr.bf16.mxu0 0
    %291 = vmatpush1.bf16.msra.mxu0 0
    %292 = vmatprep.subr.bf16.mxu0 0
    %293 = vmatpush1.bf16.msra.mxu0 0
    %294 = vmatprep.subr.bf16.mxu0 0
    %295 = vmatpush1.bf16.msra.mxu0 0
    %296 = vmatprep.subr.bf16.mxu0 0
    %297 = vmatpush1.bf16.msra.mxu0 0
    %298 = vmatprep.subr.bf16.mxu0 0
    %299 = vmatpush1.bf16.msra.mxu0 0
    %300 = vmatprep.subr.bf16.mxu0 0
    %301 = vmatpush1.bf16.msra.mxu0 0
    %302 = vmatprep.subr.bf16.mxu0 0
    %303 = vmatpush1.bf16.msra.mxu0 0
    %304 = vmatprep.subr.bf16.mxu0 0
    %305 = vmatpush1.bf16.msra.mxu0 0
    %306 = vmatprep.subr.bf16.mxu0 0
    %307 = vmatpush1.bf16.msra.mxu0 0
    %308 = vmatprep.subr.bf16.mxu0 0
    %309 = vmatpush1.bf16.msra.mxu0 0
    %310 = vmatprep.subr.bf16.mxu0 0
    %311 = vmatpush1.bf16.msra.mxu0 0
    %312 = vmatprep.subr.bf16.mxu0 0
    %313 = vmatpush1.bf16.msra.mxu0 0
    %314 = vmatprep.mubr.bf16.mxu0 0
    %315 = vmatmul.mubr.bf16.gmra.mrb[0].mxu0 %v280
    %v316 = vpop.f32.mrb[0].mxu0
    %v317 = vadd.f32 0.0, %v316
    %v318 = vpop.f32.mrb[0].mxu0
    %v319 = vpop.f32.mrb[0].mxu0
    %v320 = vadd.f32 0.0, %v319
    %v321 = vpop.f32.mrb[0].mxu0
    %322 = vdwg.mxu0
    %v323 = vadd.f32 %v256, %v317
    %v324 = vadd.f32 %v257, %v320
    %v325 = vld [vmem:[%s6] sm:$0x1]
    %v327 = vlaneseq
    %v328 = vshrl.u32 %v327, 7
    %v329 = vsub.s32 0, %v328
    %v330 = vrot.slane %v325, %v329
    %v332 = vadd.f32 %v323, %v330
    %v333 = vadd.f32 %v324, %v330
    %v334 = vmax.f32 %v332, 0.0
    %v335 = vmax.f32 %v333, 0.0
    %v336 = vld [vmem:[#allocation5] sm:$0xf]
    %v337 = vld [vmem:[#allocation5 + $0x4] sm:$0xf]
    %v338 = vld [vmem:[#allocation5 + $0x8] sm:$0xf]
    %v339 = vld [vmem:[#allocation5 + $0xc] sm:$0xf]
    %v340 = vld [vmem:[#allocation5 + $0x10] sm:$0xf]
    %v341 = vld [vmem:[#allocation5 + $0x14] sm:$0xf]
    %v342 = vld [vmem:[#allocation5 + $0x18] sm:$0xf]
    %v343 = vld [vmem:[#allocation5 + $0x1c] sm:$0xf]
    %v344 = vld [vmem:[#allocation5 + $0x20] sm:$0xf]
    %v345 = vld [vmem:[#allocation5 + $0x24] sm:$0xf]
    %v346 = vld [vmem:[#allocation5 + $0x28] sm:$0xf]
    %v347 = vld [vmem:[#allocation5 + $0x2c] sm:$0xf]
    %v348 = vld [vmem:[#allocation5 + $0x30] sm:$0xf]
    %v349 = vld [vmem:[#allocation5 + $0x34] sm:$0xf]
    %v350 = vld [vmem:[#allocation5 + $0x38] sm:$0xf]
    %v351 = vld [vmem:[#allocation5 + $0x3c] sm:$0xf]
    %v352 = vld [vmem:[%s8] sm:$0x1]
    %v353 = vpack.c.bf16 %v335, %v334
    %v355 = vlaneseq
    %v356 = vshrl.u32 %v355, 7
    %v357 = vsub.s32 0, %v356
    %v358 = vrot.slane %v352, %v357
    %v376 = vunpack.c.l.b16 %v336
    %v377 = vunpack.c.l.b16 %v337
    %v378 = vunpack.c.l.b16 %v338
    %v379 = vunpack.c.l.b16 %v339
    %v380 = vunpack.c.l.b16 %v340
    %v381 = vunpack.c.l.b16 %v341
    %v382 = vunpack.c.l.b16 %v342
    %v383 = vunpack.c.l.b16 %v343
    %v384 = vunpack.c.l.b16 %v344
    %v385 = vunpack.c.l.b16 %v345
    %v386 = vunpack.c.l.b16 %v346
    %v387 = vunpack.c.l.b16 %v347
    %v388 = vunpack.c.l.b16 %v348
    %v389 = vunpack.c.l.b16 %v349
    %v390 = vunpack.c.l.b16 %v350
    %v391 = vunpack.c.l.b16 %v351
    %v392 = vpack.c.b16 %v377, %v376
    %v393 = vpack.c.b16 %v379, %v378
    %v394 = vpack.c.b16 %v381, %v380
    %v395 = vpack.c.b16 %v383, %v382
    %v396 = vpack.c.b16 %v385, %v384
    %v397 = vpack.c.b16 %v387, %v386
    %v398 = vpack.c.b16 %v389, %v388
    %v399 = vpack.c.b16 %v391, %v390
    %408 = vmatprep.subr.bf16.mxu0 0
    %409 = vmatpush1.bf16.msra.mxu0 %v392
    %410 = vmatprep.subr.bf16.mxu0 0
    %411 = vmatpush1.bf16.msra.mxu0 %v393
    %412 = vmatprep.subr.bf16.mxu0 0
    %413 = vmatpush1.bf16.msra.mxu0 %v394
    %414 = vmatprep.subr.bf16.mxu0 0
    %415 = vmatpush1.bf16.msra.mxu0 %v395
    %416 = vmatprep.subr.bf16.mxu0 0
    %417 = vmatpush1.bf16.msra.mxu0 %v396
    %418 = vmatprep.subr.bf16.mxu0 0
    %419 = vmatpush1.bf16.msra.mxu0 %v397
    %420 = vmatprep.subr.bf16.mxu0 0
    %421 = vmatpush1.bf16.msra.mxu0 %v398
    %422 = vmatprep.subr.bf16.mxu0 0
    %423 = vmatpush1.bf16.msra.mxu0 %v399
    %424 = vmatprep.subr.bf16.mxu0 0
    %425 = vmatpush1.bf16.msra.mxu0 0
    %426 = vmatprep.subr.bf16.mxu0 0
    %427 = vmatpush1.bf16.msra.mxu0 0
    %428 = vmatprep.subr.bf16.mxu0 0
    %429 = vmatpush1.bf16.msra.mxu0 0
    %430 = vmatprep.subr.bf16.mxu0 0
    %431 = vmatpush1.bf16.msra.mxu0 0
    %432 = vmatprep.subr.bf16.mxu0 0
    %433 = vmatpush1.bf16.msra.mxu0 0
    %434 = vmatprep.subr.bf16.mxu0 0
    %435 = vmatpush1.bf16.msra.mxu0 0
    %436 = vmatprep.subr.bf16.mxu0 0
    %437 = vmatpush1.bf16.msra.mxu0 0
    %438 = vmatprep.subr.bf16.mxu0 0
    %439 = vmatpush1.bf16.msra.mxu0 0
    %440 = vmatprep.mubr.bf16.mxu0 0
    %441 = vmatmul.mubr.bf16.gmra.mrb[0].mxu0 %v353
    %v442 = vpop.f32.mrb[0].mxu0
    %v443 = vadd.f32 %v358, %v442
    %v444 = vpop.f32.mrb[0].mxu0
    %v445 = vpop.f32.mrb[0].mxu0
    %v446 = vadd.f32 %v358, %v445
    %v447 = vpop.f32.mrb[0].mxu0
    %448 = vdwg.mxu0
    %v449 = vmax.f32 %v443, 0.0
    %v450 = vmax.f32 %v446, 0.0
    %v451 = vpack.c.bf16 %v450, %v449
    %v453 = vunpack.c.l.b16 %v451
    %v454 = vunpack.c.h.b16 %v451
    %v455 = vpack.c.b16 %v453, %v453
    %v456 = vpack.c.b16 %v454, %v454
    %459 = vst [vmem:[#allocation7] sm:$0xf] %v455
    %460 = vst [vmem:[#allocation7 + $0x4] sm:$0xf] %v456
    // Predicated region
    $region46: #{tpu_custom_call.1} parent=1 // pred_check
      _
    $region47: #{tpu_custom_call.1} parent=1 // pred_check_branch
      %462 = sbr.rel (0) target = $region49
    $region48: #{tpu_custom_call.1} parent=1 // pred_region
      %s464 = ssub.s32 128, 128
      %465 = vsyncadd [#allocation4], %s464
      %s466 = sshll.u32 [#allocation7], 4
      %s467 = int_to_ptr.vmem [resolvable:$true] %s466
      %472 = dma.vmem_to_hbm [thread:$0]  %s467, 128, %s9, [#allocation4], 64, 64, 4
    $region49: #{tpu_custom_call.1} parent=1 // pred_fallthru
      _
    // Predicated region
    $region50: #{tpu_custom_call.1} parent=1 // pred_check
      _
    $region51: #{tpu_custom_call.1} parent=1 // pred_check_branch
      %474 = sbr.rel (0) target = $region53
    $region52: #{tpu_custom_call.1} parent=1 // pred_region
      %475 = dma.done [#allocation4], 128
    $region53: #{tpu_custom_call.1} parent=1 // pred_fallthru
      _
    %476 = vsyncpa [#allocation3], 1
    %477 = vsyncpa [#allocation6], 1
    %478 = vsyncpa [#allocation4], 1

// kernel: tpu_custom_call.1
$region0: #{tpu_custom_call.1}
  #allocation0 [shape = 'u32[]', space=smem, size = 0x4, offset = 0x4, fixed_abs, tag = 'smem constant byte address 0x4 - core index']
  #allocation1 [shape = 'u32[144,128]{1,0:T(1,128)}', space=vmem, size = 0x12000, scoped, tag = 'internal scratch']
  %s0 = inlined_call_operand.vmem [shape: s32[16,3], index: 0, kind: input, shape index: {}]
  %s1 = inlined_call_operand.vmem [shape: bf16[16,16], index: 1, kind: input, shape index: {}]
  %s2 = inlined_call_operand.vmem [shape: bf16[16,128], index: 2, kind: input, shape index: {}]
  %s3 = inlined_call_operand.vmem [shape: bf16[16,128], index: 3, kind: input, shape index: {}]
  %s4 = inlined_call_operand.vmem [shape: bf16[16,128], index: 4, kind: input, shape index: {}]
  %s5 = inlined_call_operand.hbm [shape: bf16[16,128], index: 5, kind: input, shape index: {}]
  %s6 = inlined_call_operand.vmem [shape: f32[1,128], index: 6, kind: input, shape index: {}]
  %s7 = inlined_call_operand.hbm [shape: bf16[128,128], index: 7, kind: input, shape index: {}]
  %s8 = inlined_call_operand.vmem [shape: f32[1,128], index: 8, kind: input, shape index: {}]
  %s9 = inlined_call_operand.hbm [shape: bf16[16,128], index: 9, kind: output, shape index: {}]
  %s10 = sld [smem:[#allocation0]]
  $region54: #{tpu_custom_call.1} parent=0
    _
  %s12 = ssub.s32 1, %s10
  %s13 = scalar_select 0, %s12, %s10
  $region1: #{tpu_custom_call.1} parent=0
    #allocation2 [shape = 'u8[4096]{0}', space=vmem, size = 0x1000, scoped, tag = 'input window, operand 5, single buffered']
    #allocation3 [shape = 's32[1]{0}', space=sflag, size = 0x4, scoped, tag = 'scoped memory for tpu_custom_call.1']
    #allocation4 [shape = 's32[1]{0}', space=sflag, size = 0x4, scoped, tag = 'scoped memory for tpu_custom_call.1']
    #allocation5 [shape = 'u8[32768]{0}', space=vmem, size = 0x8000, scoped, tag = 'input window, operand 7, single buffered']
    #allocation6 [shape = 's32[1]{0}', space=sflag, size = 0x4, scoped, tag = 'scoped memory for tpu_custom_call.1']
    #allocation7 [shape = 'u8[4096]{0}', space=vmem, size = 0x1000, scoped, tag = 'output window, operand 0, single buffered']
    %14 = vsyncpa [#allocation3], 0
    %15 = vsyncpa [#allocation6], 0
    %16 = vsyncpa [#allocation4], 0
    // Predicated region
    $region2: #{tpu_custom_call.1} parent=1 // pred_check
      _
    $region3: #{tpu_custom_call.1} parent=1 // pred_check_branch
      %18 = sbr.rel (0) target = $region5
    $region4: #{tpu_custom_call.1} parent=1 // pred_region
      _
    $region5: #{tpu_custom_call.1} parent=1 // pred_fallthru
      _
    // Predicated region
    $region6: #{tpu_custom_call.1} parent=1 // pred_check
      _
    $region7: #{tpu_custom_call.1} parent=1 // pred_check_branch
      %20 = sbr.rel (0) target = $region9
    $region8: #{tpu_custom_call.1} parent=1 // pred_region
      _
    $region9: #{tpu_custom_call.1} parent=1 // pred_fallthru
      _
    // Predicated region
    $region10: #{tpu_custom_call.1} parent=1 // pred_check
      _
    $region11: #{tpu_custom_call.1} parent=1 // pred_check_branch
      %22 = sbr.rel (0) target = $region13
    $region12: #{tpu_custom_call.1} parent=1 // pred_region
      _
    $region13: #{tpu_custom_call.1} parent=1 // pred_fallthru
      _
    // Predicated region
    $region14: #{tpu_custom_call.1} parent=1 // pred_check
      _
    $region15: #{tpu_custom_call.1} parent=1 // pred_check_branch
      %24 = sbr.rel (0) target = $region17
    $region16: #{tpu_custom_call.1} parent=1 // pred_region
      _
    $region17: #{tpu_custom_call.1} parent=1 // pred_fallthru
      _
    // Predicated region
    $region18: #{tpu_custom_call.1} parent=1 // pred_check
      _
    $region19: #{tpu_custom_call.1} parent=1 // pred_check_branch
      %26 = sbr.rel (0) target = $region21
    $region20: #{tpu_custom_call.1} parent=1 // pred_region
      _
    $region21: #{tpu_custom_call.1} parent=1 // pred_fallthru
      _
    // Predicated region
    $region22: #{tpu_custom_call.1} parent=1 // pred_check
      _
    $region23: #{tpu_custom_call.1} parent=1 // pred_check_branch
      %28 = sbr.rel (0) target = $region25
    $region24: #{tpu_custom_call.1} parent=1 // pred_region
      %s30 = ssub.s32 128, 128
      %31 = vsyncadd [#allocation3], %s30
      %s32 = sshll.u32 [#allocation2], 4
      %s33 = int_to_ptr.vmem [resolvable:$true] %s32
      %38 = dma.hbm_to_vmem [thread:$0]  %s5, 128, %s33, [#allocation3], 64, 64, 4
    $region25: #{tpu_custom_call.1} parent=1 // pred_fallthru
      _
    // Predicated region
    $region26: #{tpu_custom_call.1} parent=1 // pred_check
      _
    $region27: #{tpu_custom_call.1} parent=1 // pred_check_branch
      %40 = sbr.rel (0) target = $region29
    $region28: #{tpu_custom_call.1} parent=1 // pred_region
      _
    $region29: #{tpu_custom_call.1} parent=1 // pred_fallthru
      _
    // Predicated region
    $region30: #{tpu_custom_call.1} parent=1 // pred_check
      _
    $region31: #{tpu_custom_call.1} parent=1 // pred_check_branch
      %42 = sbr.rel (0) target = $region33
    $region32: #{tpu_custom_call.1} parent=1 // pred_region
      %s44 = ssub.s32 1024, 1024
      %45 = vsyncadd [#allocation6], %s44
      %s46 = sshll.u32 [#allocation5], 4
      %s47 = int_to_ptr.vmem [resolvable:$true] %s46
      %52 = dma.hbm_to_vmem [thread:$0]  %s7, 1024, %s47, [#allocation6], 64, 64, 4
    $region33: #{tpu_custom_call.1} parent=1 // pred_fallthru
      _
    // Predicated region
    $region34: #{tpu_custom_call.1} parent=1 // pred_check
      _
    $region35: #{tpu_custom_call.1} parent=1 // pred_check_branch
      %54 = sbr.rel (0) target = $region37
    $region36: #{tpu_custom_call.1} parent=1 // pred_region
      _
    $region37: #{tpu_custom_call.1} parent=1 // pred_fallthru
      _
    // Predicated region
    $region38: #{tpu_custom_call.1} parent=1 // pred_check
      _
    $region39: #{tpu_custom_call.1} parent=1 // pred_check_branch
      %56 = sbr.rel (0) target = $region41
    $region40: #{tpu_custom_call.1} parent=1 // pred_region
      %57 = dma.done [#allocation3], 128
    $region41: #{tpu_custom_call.1} parent=1 // pred_fallthru
      _
    // Predicated region
    $region42: #{tpu_custom_call.1} parent=1 // pred_check
      _
    $region43: #{tpu_custom_call.1} parent=1 // pred_check_branch
      %59 = sbr.rel (0) target = $region45
    $region44: #{tpu_custom_call.1} parent=1 // pred_region
      %60 = dma.done [#allocation6], 1024
    $region45: #{tpu_custom_call.1} parent=1 // pred_fallthru
      _
    %v62 = vld [vmem:[%s0] sm:$0xff]
    %v63 = vld [vmem:[%s0 + $0x8] sm:$0xff]
    %v64 = vld [vmem:[#allocation2] sm:$0xf]
    %v65 = vld [vmem:[#allocation2 + $0x4] sm:$0xf]
    %v66 = vld [vmem:[%s1] sm:$0xf]
    %v67 = vld [vmem:[%s1 + $0x4] sm:$0xf]
    %v68 = vld [vmem:[%s2] sm:$0xf]
    %v69 = vld [vmem:[%s2 + $0x4] sm:$0xf]
    %v70 = vlaneseq
    %v71 = vand.u32 %v70, 127
    %72 = vset.pattern.permute.xlu0 0
    %73 = vperm.xlu0 %72, %v62
    %v74 = vpop.permute.xlu0 %73
    %75 = vset.pattern.permute.xlu0 0
    %76 = vperm.xlu0 %75, %v63
    %v77 = vpop.permute.xlu0 %76
    %vm78 = vcmp.eq.s32.totalorder %v74, %v71
    %vm79 = vcmp.eq.s32.totalorder %v77, %v71
    %v80 = vsel %vm78, 1, 0
    %v81 = vsel %vm79, 1, 0
    %v82 = vcvt.s32.f32 %v80
    %v83 = vcvt.s32.f32 %v81
    %v84 = vpack.c.bf16 %v83, %v82
    %v87 = vunpack.c.l.b16 %v68
    %v88 = vunpack.c.l.b16 %v69
    %v89 = vpack.c.b16 %v88, %v87
    %vm91 = vcmask 130048
    %v93 = vsel %vm91, %v84, 0
    %95 = vmatprep.subr.bf16.mxu0 0
    %96 = vmatpush1.bf16.msra.mxu0 %v89
    %97 = vmatprep.subr.bf16.mxu0 0
    %98 = vmatpush1.bf16.msra.mxu0 0
    %99 = vmatprep.subr.bf16.mxu0 0
    %100 = vmatpush1.bf16.msra.mxu0 0
    %101 = vmatprep.subr.bf16.mxu0 0
    %102 = vmatpush1.bf16.msra.mxu0 0
    %103 = vmatprep.subr.bf16.mxu0 0
    %104 = vmatpush1.bf16.msra.mxu0 0
    %105 = vmatprep.subr.bf16.mxu0 0
    %106 = vmatpush1.bf16.msra.mxu0 0
    %107 = vmatprep.subr.bf16.mxu0 0
    %108 = vmatpush1.bf16.msra.mxu0 0
    %109 = vmatprep.subr.bf16.mxu0 0
    %110 = vmatpush1.bf16.msra.mxu0 0
    %111 = vmatprep.subr.bf16.mxu0 0
    %112 = vmatpush1.bf16.msra.mxu0 0
    %113 = vmatprep.subr.bf16.mxu0 0
    %114 = vmatpush1.bf16.msra.mxu0 0
    %115 = vmatprep.subr.bf16.mxu0 0
    %116 = vmatpush1.bf16.msra.mxu0 0
    %117 = vmatprep.subr.bf16.mxu0 0
    %118 = vmatpush1.bf16.msra.mxu0 0
    %119 = vmatprep.subr.bf16.mxu0 0
    %120 = vmatpush1.bf16.msra.mxu0 0
    %121 = vmatprep.subr.bf16.mxu0 0
    %122 = vmatpush1.bf16.msra.mxu0 0
    %123 = vmatprep.subr.bf16.mxu0 0
    %124 = vmatpush1.bf16.msra.mxu0 0
    %125 = vmatprep.subr.bf16.mxu0 0
    %126 = vmatpush1.bf16.msra.mxu0 0
    %127 = vmatprep.mubr.bf16.mxu0 0
    %128 = vmatmul.mubr.bf16.gmra.mrb[0].mxu0 %v93
    %v129 = vpop.f32.mrb[0].mxu0
    %v130 = vadd.f32 0.0, %v129
    %v131 = vpop.f32.mrb[0].mxu0
    %v132 = vpop.f32.mrb[0].mxu0
    %v133 = vadd.f32 0.0, %v132
    %v134 = vpop.f32.mrb[0].mxu0
    %135 = vdwg.mxu0
    %v138 = vunpack.c.l.b16 %v66
    %v139 = vunpack.c.l.b16 %v67
    %v140 = vpack.c.b16 %v139, %v138
    %v143 = vunpack.c.l.b16 %v64
    %v144 = vunpack.c.l.b16 %v65
    %v145 = vpack.c.b16 %v144, %v143
    %v148 = vsel %vm91, %v140, 0
    %150 = vmatprep.subr.bf16.mxu0 0
    %151 = vmatpush1.bf16.msra.mxu0 %v145
    %152 = vmatprep.subr.bf16.mxu0 0
    %153 = vmatpush1.bf16.msra.mxu0 0
    %154 = vmatprep.subr.bf16.mxu0 0
    %155 = vmatpush1.bf16.msra.mxu0 0
    %156 = vmatprep.subr.bf16.mxu0 0
    %157 = vmatpush1.bf16.msra.mxu0 0
    %158 = vmatprep.subr.bf16.mxu0 0
    %159 = vmatpush1.bf16.msra.mxu0 0
    %160 = vmatprep.subr.bf16.mxu0 0
    %161 = vmatpush1.bf16.msra.mxu0 0
    %162 = vmatprep.subr.bf16.mxu0 0
    %163 = vmatpush1.bf16.msra.mxu0 0
    %164 = vmatprep.subr.bf16.mxu0 0
    %165 = vmatpush1.bf16.msra.mxu0 0
    %166 = vmatprep.subr.bf16.mxu0 0
    %167 = vmatpush1.bf16.msra.mxu0 0
    %168 = vmatprep.subr.bf16.mxu0 0
    %169 = vmatpush1.bf16.msra.mxu0 0
    %170 = vmatprep.subr.bf16.mxu0 0
    %171 = vmatpush1.bf16.msra.mxu0 0
    %172 = vmatprep.subr.bf16.mxu0 0
    %173 = vmatpush1.bf16.msra.mxu0 0
    %174 = vmatprep.subr.bf16.mxu0 0
    %175 = vmatpush1.bf16.msra.mxu0 0
    %176 = vmatprep.subr.bf16.mxu0 0
    %177 = vmatpush1.bf16.msra.mxu0 0
    %178 = vmatprep.subr.bf16.mxu0 0
    %179 = vmatpush1.bf16.msra.mxu0 0
    %180 = vmatprep.subr.bf16.mxu0 0
    %181 = vmatpush1.bf16.msra.mxu0 0
    %182 = vmatprep.mubr.bf16.mxu0 0
    %183 = vmatmul.mubr.bf16.gmra.mrb[0].mxu0 %v148
    %v184 = vpop.f32.mrb[0].mxu0
    %v185 = vadd.f32 %v130, %v184
    %v186 = vpop.f32.mrb[0].mxu0
    %v187 = vpop.f32.mrb[0].mxu0
    %v188 = vadd.f32 %v133, %v187
    %v189 = vpop.f32.mrb[0].mxu0
    %190 = vdwg.mxu0
    %v191 = vld [vmem:[%s3] sm:$0xf]
    %v192 = vld [vmem:[%s3 + $0x4] sm:$0xf]
    %193 = vset.pattern.permute.xlu0 1
    %194 = vperm.xlu0 %193, %v62
    %v195 = vpop.permute.xlu0 %194
    %196 = vset.pattern.permute.xlu0 1
    %197 = vperm.xlu0 %196, %v63
    %v198 = vpop.permute.xlu0 %197
    %vm199 = vcmp.eq.s32.totalorder %v195, %v71
    %vm200 = vcmp.eq.s32.totalorder %v198, %v71
    %v201 = vsel %vm199, 1, 0
    %v202 = vsel %vm200, 1, 0
    %v203 = vcvt.s32.f32 %v201
    %v204 = vcvt.s32.f32 %v202
    %v205 = vpack.c.bf16 %v204, %v203
    %v208 = vunpack.c.l.b16 %v191
    %v209 = vunpack.c.l.b16 %v192
    %v210 = vpack.c.b16 %v209, %v208
    %v213 = vsel %vm91, %v205, 0
    %215 = vmatprep.subr.bf16.mxu0 0
    %216 = vmatpush1.bf16.msra.mxu0 %v210
    %217 = vmatprep.subr.bf16.mxu0 0
    %218 = vmatpush1.bf16.msra.mxu0 0
    %219 = vmatprep.subr.bf16.mxu0 0
    %220 = vmatpush1.bf16.msra.mxu0 0
    %221 = vmatprep.subr.bf16.mxu0 0
    %222 = vmatpush1.bf16.msra.mxu0 0
    %223 = vmatprep.subr.bf16.mxu0 0
    %224 = vmatpush1.bf16.msra.mxu0 0
    %225 = vmatprep.subr.bf16.mxu0 0
    %226 = vmatpush1.bf16.msra.mxu0 0
    %227 = vmatprep.subr.bf16.mxu0 0
    %228 = vmatpush1.bf16.msra.mxu0 0
    %229 = vmatprep.subr.bf16.mxu0 0
    %230 = vmatpush1.bf16.msra.mxu0 0
    %231 = vmatprep.subr.bf16.mxu0 0
    %232 = vmatpush1.bf16.msra.mxu0 0
    %233 = vmatprep.subr.bf16.mxu0 0
    %234 = vmatpush1.bf16.msra.mxu0 0
    %235 = vmatprep.subr.bf16.mxu0 0
    %236 = vmatpush1.bf16.msra.mxu0 0
    %237 = vmatprep.subr.bf16.mxu0 0
    %238 = vmatpush1.bf16.msra.mxu0 0
    %239 = vmatprep.subr.bf16.mxu0 0
    %240 = vmatpush1.bf16.msra.mxu0 0
    %241 = vmatprep.subr.bf16.mxu0 0
    %242 = vmatpush1.bf16.msra.mxu0 0
    %243 = vmatprep.subr.bf16.mxu0 0
    %244 = vmatpush1.bf16.msra.mxu0 0
    %245 = vmatprep.subr.bf16.mxu0 0
    %246 = vmatpush1.bf16.msra.mxu0 0
    %247 = vmatprep.mubr.bf16.mxu0 0
    %248 = vmatmul.mubr.bf16.gmra.mrb[0].mxu0 %v213
    %v249 = vpop.f32.mrb[0].mxu0
    %v250 = vadd.f32 0.0, %v249
    %v251 = vpop.f32.mrb[0].mxu0
    %v252 = vpop.f32.mrb[0].mxu0
    %v253 = vadd.f32 0.0, %v252
    %v254 = vpop.f32.mrb[0].mxu0
    %255 = vdwg.mxu0
    %v256 = vadd.f32 %v185, %v250
    %v257 = vadd.f32 %v188, %v253
    %v258 = vld [vmem:[%s4] sm:$0xf]
    %v259 = vld [vmem:[%s4 + $0x4] sm:$0xf]
    %260 = vset.pattern.permute.xlu0 2
    %261 = vperm.xlu0 %260, %v62
    %v262 = vpop.permute.xlu0 %261
    %263 = vset.pattern.permute.xlu0 2
    %264 = vperm.xlu0 %263, %v63
    %v265 = vpop.permute.xlu0 %264
    %vm266 = vcmp.eq.s32.totalorder %v262, %v71
    %vm267 = vcmp.eq.s32.totalorder %v265, %v71
    %v268 = vsel %vm266, 1, 0
    %v269 = vsel %vm267, 1, 0
    %v270 = vcvt.s32.f32 %v268
    %v271 = vcvt.s32.f32 %v269
    %v272 = vpack.c.bf16 %v271, %v270
    %v275 = vunpack.c.l.b16 %v258
    %v276 = vunpack.c.l.b16 %v259
    %v277 = vpack.c.b16 %v276, %v275
    %v280 = vsel %vm91, %v272, 0
    %282 = vmatprep.subr.bf16.mxu0 0
    %283 = vmatpush1.bf16.msra.mxu0 %v277
    %284 = vmatprep.subr.bf16.mxu0 0
    %285 = vmatpush1.bf16.msra.mxu0 0
    %286 = vmatprep.subr.bf16.mxu0 0
    %287 = vmatpush1.bf16.msra.mxu0 0
    %288 = vmatprep.subr.bf16.mxu0 0
    %289 = vmatpush1.bf16.msra.mxu0 0
    %290 = vmatprep.subr.bf16.mxu0 0
    %291 = vmatpush1.bf16.msra.mxu0 0
    %292 = vmatprep.subr.bf16.mxu0 0
    %293 = vmatpush1.bf16.msra.mxu0 0
    %294 = vmatprep.subr.bf16.mxu0 0
    %295 = vmatpush1.bf16.msra.mxu0 0
    %296 = vmatprep.subr.bf16.mxu0 0
    %297 = vmatpush1.bf16.msra.mxu0 0
    %298 = vmatprep.subr.bf16.mxu0 0
    %299 = vmatpush1.bf16.msra.mxu0 0
    %300 = vmatprep.subr.bf16.mxu0 0
    %301 = vmatpush1.bf16.msra.mxu0 0
    %302 = vmatprep.subr.bf16.mxu0 0
    %303 = vmatpush1.bf16.msra.mxu0 0
    %304 = vmatprep.subr.bf16.mxu0 0
    %305 = vmatpush1.bf16.msra.mxu0 0
    %306 = vmatprep.subr.bf16.mxu0 0
    %307 = vmatpush1.bf16.msra.mxu0 0
    %308 = vmatprep.subr.bf16.mxu0 0
    %309 = vmatpush1.bf16.msra.mxu0 0
    %310 = vmatprep.subr.bf16.mxu0 0
    %311 = vmatpush1.bf16.msra.mxu0 0
    %312 = vmatprep.subr.bf16.mxu0 0
    %313 = vmatpush1.bf16.msra.mxu0 0
    %314 = vmatprep.mubr.bf16.mxu0 0
    %315 = vmatmul.mubr.bf16.gmra.mrb[0].mxu0 %v280
    %v316 = vpop.f32.mrb[0].mxu0
    %v317 = vadd.f32 0.0, %v316
    %v318 = vpop.f32.mrb[0].mxu0
    %v319 = vpop.f32.mrb[0].mxu0
    %v320 = vadd.f32 0.0, %v319
    %v321 = vpop.f32.mrb[0].mxu0
    %322 = vdwg.mxu0
    %v323 = vadd.f32 %v256, %v317
    %v324 = vadd.f32 %v257, %v320
    %v325 = vld [vmem:[%s6] sm:$0x1]
    %v327 = vlaneseq
    %v328 = vshrl.u32 %v327, 7
    %v329 = vsub.s32 0, %v328
    %v330 = vrot.slane %v325, %v329
    %v332 = vadd.f32 %v323, %v330
    %v333 = vadd.f32 %v324, %v330
    %v334 = vmax.f32 %v332, 0.0
    %v335 = vmax.f32 %v333, 0.0
    %v336 = vld [vmem:[#allocation5] sm:$0xf]
    %v337 = vld [vmem:[#allocation5 + $0x4] sm:$0xf]
    %v338 = vld [vmem:[#allocation5 + $0x8] sm:$0xf]
    %v339 = vld [vmem:[#allocation5 + $0xc] sm:$0xf]
    %v340 = vld [vmem:[#allocation5 + $0x10] sm:$0xf]
    %v341 = vld [vmem:[#allocation5 + $0x14] sm:$0xf]
    %v342 = vld [vmem:[#allocation5 + $0x18] sm:$0xf]
    %v343 = vld [vmem:[#allocation5 + $0x1c] sm:$0xf]
    %v344 = vld [vmem:[#allocation5 + $0x20] sm:$0xf]
    %v345 = vld [vmem:[#allocation5 + $0x24] sm:$0xf]
    %v346 = vld [vmem:[#allocation5 + $0x28] sm:$0xf]
    %v347 = vld [vmem:[#allocation5 + $0x2c] sm:$0xf]
    %v348 = vld [vmem:[#allocation5 + $0x30] sm:$0xf]
    %v349 = vld [vmem:[#allocation5 + $0x34] sm:$0xf]
    %v350 = vld [vmem:[#allocation5 + $0x38] sm:$0xf]
    %v351 = vld [vmem:[#allocation5 + $0x3c] sm:$0xf]
    %v352 = vld [vmem:[%s8] sm:$0x1]
    %v353 = vpack.c.bf16 %v335, %v334
    %v355 = vlaneseq
    %v356 = vshrl.u32 %v355, 7
    %v357 = vsub.s32 0, %v356
    %v358 = vrot.slane %v352, %v357
    %v376 = vunpack.c.l.b16 %v336
    %v377 = vunpack.c.l.b16 %v337
    %v378 = vunpack.c.l.b16 %v338
    %v379 = vunpack.c.l.b16 %v339
    %v380 = vunpack.c.l.b16 %v340
    %v381 = vunpack.c.l.b16 %v341
    %v382 = vunpack.c.l.b16 %v342
    %v383 = vunpack.c.l.b16 %v343
    %v384 = vunpack.c.l.b16 %v344
    %v385 = vunpack.c.l.b16 %v345
    %v386 = vunpack.c.l.b16 %v346
    %v387 = vunpack.c.l.b16 %v347
    %v388 = vunpack.c.l.b16 %v348
    %v389 = vunpack.c.l.b16 %v349
    %v390 = vunpack.c.l.b16 %v350
    %v391 = vunpack.c.l.b16 %v351
    %v392 = vpack.c.b16 %v377, %v376
    %v393 = vpack.c.b16 %v379, %v378
    %v394 = vpack.c.b16 %v381, %v380
    %v395 = vpack.c.b16 %v383, %v382
    %v396 = vpack.c.b16 %v385, %v384
    %v397 = vpack.c.b16 %v387, %v386
    %v398 = vpack.c.b16 %v389, %v388
    %v399 = vpack.c.b16 %v391, %v390
    %408 = vmatprep.subr.bf16.mxu0 0
    %409 = vmatpush1.bf16.msra.mxu0 %v392
    %410 = vmatprep.subr.bf16.mxu0 0
    %411 = vmatpush1.bf16.msra.mxu0 %v393
    %412 = vmatprep.subr.bf16.mxu0 0
    %413 = vmatpush1.bf16.msra.mxu0 %v394
    %414 = vmatprep.subr.bf16.mxu0 0
    %415 = vmatpush1.bf16.msra.mxu0 %v395
    %416 = vmatprep.subr.bf16.mxu0 0
    %417 = vmatpush1.bf16.msra.mxu0 %v396
    %418 = vmatprep.subr.bf16.mxu0 0
    %419 = vmatpush1.bf16.msra.mxu0 %v397
    %420 = vmatprep.subr.bf16.mxu0 0
    %421 = vmatpush1.bf16.msra.mxu0 %v398
    %422 = vmatprep.subr.bf16.mxu0 0
    %423 = vmatpush1.bf16.msra.mxu0 %v399
    %424 = vmatprep.subr.bf16.mxu0 0
    %425 = vmatpush1.bf16.msra.mxu0 0
    %426 = vmatprep.subr.bf16.mxu0 0
    %427 = vmatpush1.bf16.msra.mxu0 0
    %428 = vmatprep.subr.bf16.mxu0 0
    %429 = vmatpush1.bf16.msra.mxu0 0
    %430 = vmatprep.subr.bf16.mxu0 0
    %431 = vmatpush1.bf16.msra.mxu0 0
    %432 = vmatprep.subr.bf16.mxu0 0
    %433 = vmatpush1.bf16.msra.mxu0 0
    %434 = vmatprep.subr.bf16.mxu0 0
    %435 = vmatpush1.bf16.msra.mxu0 0
    %436 = vmatprep.subr.bf16.mxu0 0
    %437 = vmatpush1.bf16.msra.mxu0 0
    %438 = vmatprep.subr.bf16.mxu0 0
    %439 = vmatpush1.bf16.msra.mxu0 0
    %440 = vmatprep.mubr.bf16.mxu0 0
    %441 = vmatmul.mubr.bf16.gmra.mrb[0].mxu0 %v353
    %v442 = vpop.f32.mrb[0].mxu0
    %v443 = vadd.f32 %v358, %v442
    %v444 = vpop.f32.mrb[0].mxu0
    %v445 = vpop.f32.mrb[0].mxu0
    %v446 = vadd.f32 %v358, %v445
    %v447 = vpop.f32.mrb[0].mxu0
    %448 = vdwg.mxu0
    %v449 = vmax.f32 %v443, 0.0
    %v450 = vmax.f32 %v446, 0.0
    %v451 = vpack.c.bf16 %v450, %v449
    %v453 = vunpack.c.l.b16 %v451
    %v454 = vunpack.c.h.b16 %v451
    %v455 = vpack.c.b16 %v453, %v453
    %v456 = vpack.c.b16 %v454, %v454
    %459 = vst [vmem:[#allocation7] sm:$0xf] %v455
    %460 = vst [vmem:[#allocation7 + $0x4] sm:$0xf] %v456
    // Predicated region
    $region46: #{tpu_custom_call.1} parent=1 // pred_check
      _
    $region47: #{tpu_custom_call.1} parent=1 // pred_check_branch
      %462 = sbr.rel (0) target = $region49
    $region48: #{tpu_custom_call.1} parent=1 // pred_region
      %s464 = ssub.s32 128, 128
      %465 = vsyncadd [#allocation4], %s464
      %s466 = sshll.u32 [#allocation7], 4
      %s467 = int_to_ptr.vmem [resolvable:$true] %s466
      %472 = dma.vmem_to_hbm [thread:$0]  %s467, 128, %s9, [#allocation4], 64, 64, 4
    $region49: #{tpu_custom_call.1} parent=1 // pred_fallthru
      _
    // Predicated region
    $region50: #{tpu_custom_call.1} parent=1 // pred_check
      _
    $region51: #{tpu_custom_call.1} parent=1 // pred_check_branch
      %474 = sbr.rel (0) target = $region53
    $region52: #{tpu_custom_call.1} parent=1 // pred_region
      %475 = dma.done [#allocation4], 128
    $region53: #{tpu_custom_call.1} parent=1 // pred_fallthru
      _
    %476 = vsyncpa [#allocation3], 1
    %477 = vsyncpa [#allocation6], 1
    %478 = vsyncpa [#allocation4], 1

</llo_original>
